<compile_context>
chip_gen: v5e
topology: v5e:2x2
jax: 0.10.0
libtpu: 0.0.40
codegen_flags: <defaults>
</compile_context>

<pallas_src>
import functools

import jax
import jax.numpy as jnp
from jax import lax
from jax.experimental import pallas as pl
from jax.experimental.pallas import tpu as pltpu

GB = 128  # gate block width: one lane tile per GRU gate (r, z, n)


# ----------------------------------------------------------------------------
# Static layout of the packed parameter slab (rows, 3*GB)
# ----------------------------------------------------------------------------
def _layout(E, H, DA, n_head, n_class):
    D = 2 * H
    r_wih = 0                        # (2E, 3GB)  input->gates, fwd rows then bwd rows
    r_whh = r_wih + 2 * E            # (GB, 3GB)  hidden->gates, block-diag over direction
    r_bih = r_whh + GB               # (1, 3GB)
    r_bhh = r_bih + 1                # (1, 3GB)
    r_ws1 = ((r_bhh + 1 + 7) // 8) * 8     # (D, DA)        in cols [0, DA)
    r_ws2 = r_ws1 + D                      # (DA, n_head)   in cols [0, n_head)
    r_wout = r_ws2 + DA                    # (n_head*D, n_class)
    r_bout = r_wout + n_head * D           # (1, n_class)
    rows = ((r_bout + 1 + 7) // 8) * 8
    return dict(wih=r_wih, whh=r_whh, bih=r_bih, bhh=r_bhh,
                ws1=r_ws1, ws2=r_ws2, wout=r_wout, bout=r_bout, rows=rows)


# ----------------------------------------------------------------------------
# Fused kernel: bidirectional GRU + structured self-attention + output head
# ----------------------------------------------------------------------------
def sentence_classifier_kernel(x_ref, p_ref, out_ref, *,
                               T, E, H, DA, n_head, n_class):
    D = 2 * H
    L = _layout(E, H, DA, n_head, n_class)

    w_ih = p_ref[L['wih']:L['wih'] + 2 * E, :]       # (2E, 3GB)
    w_hh = p_ref[L['whh']:L['whh'] + GB, :]          # (GB, 3GB)
    b_ih = p_ref[L['bih']:L['bih'] + 1, :]           # (1, 3GB)
    b_hh = p_ref[L['bhh']:L['bhh'] + 1, :]           # (1, 3GB)

    # Input projection for BOTH directions in one (T,2E)x(2E,3GB) matmul,
    # hoisted out of the serial recurrence.  x_ref rows already carry
    # [x[t] | x[T-1-t]], so no per-step direction select is needed.
    gx = jnp.dot(x_ref[...], w_ih, preferred_element_type=jnp.float32) + b_ih   # (T, 3GB)

    # Fused fwd+bwd recurrence.  h = [h_fwd(H) | h_bwd(H) | 0 pad] in one
    # 128-lane vreg; gate slices are 128-lane aligned, so the serial chain is
    # one MXU matmul + VPU/EUP gate math per step.  T is tiny & static -> unroll.
    h = jnp.zeros((1, GB), dtype=jnp.float32)
    rows_f = [None] * T
    rows_b = [None] * T
    for s in range(T):
        g_x = gx[s:s + 1, :]
        gh = jnp.dot(h, w_hh, preferred_element_type=jnp.float32) + b_hh        # (1, 3GB)
        # PyTorch GRU semantics (gate order r, z, n; b_hn stays inside r*(...)).
        r = jax.nn.sigmoid(g_x[:, 0:GB] + gh[:, 0:GB])
        z = jax.nn.sigmoid(g_x[:, GB:2 * GB] + gh[:, GB:2 * GB])
        n = jnp.tanh(g_x[:, 2 * GB:3 * GB] + r * gh[:, 2 * GB:3 * GB])
        h = (1.0 - z) * n + z * h
        rows_f[s] = h               # fwd hidden for time s lives in lanes [0, H)
        rows_b[T - 1 - s] = h       # bwd hidden for time T-1-s lives in lanes [H, 2H)

    Hf = jnp.concatenate(rows_f, axis=0)[:, 0:H]          # (T, H)
    Hb = jnp.concatenate(rows_b, axis=0)[:, H:2 * H]      # (T, H)
    Hs = jnp.concatenate([Hf, Hb], axis=1)                # (T, 2H) = [fwd | bwd]

    # ---------------- structured self-attention (Lin et al.) ----------------
    ws1 = p_ref[L['ws1']:L['ws1'] + D, 0:DA]                                     # (D, DA)
    ws2 = p_ref[L['ws2']:L['ws2'] + DA, 0:n_head]                                # (DA, n_head)
    wout = p_ref[L['wout']:L['wout'] + n_head * D, 0:n_class]                    # (n_head*D, C)
    bout = p_ref[L['bout']:L['bout'] + 1, 0:n_class]                             # (1, C)

    u = jnp.tanh(jnp.dot(Hs, ws1, preferred_element_type=jnp.float32))           # (T, DA)
    scores = jnp.dot(u, ws2, preferred_element_type=jnp.float32)                 # (T, n_head)
    scores = scores - jnp.max(scores, axis=0, keepdims=True)
    e = jnp.exp(scores)
    A = e / jnp.sum(e, axis=0, keepdims=True)          # softmax over time (exact divide)

    # ---------------- output head: one lane-aligned matmul ------------------
    # M_flat[0, h*D + d] = sum_t A[t, h] * Hs[t, d]  -> (1, n_head*D) = (1, 128)
    A_exp = jnp.concatenate(
        [jnp.broadcast_to(A[:, hh:hh + 1], (T, D)) for hh in range(n_head)], axis=1)
    Hs_rep = jnp.concatenate([Hs] * n_head, axis=1)
    M_flat = jnp.sum(A_exp * Hs_rep, axis=0, keepdims=True)                      # (1, n_head*D)
    logits = jnp.dot(M_flat, wout, preferred_element_type=jnp.float32) + bout    # (1, C)

    # F.softmax over classes — EXACT (probs must sum to 1; approx reciprocal
    # here is what broke the previous version).
    z0 = logits - jnp.max(logits, axis=1, keepdims=True)
    ez = jnp.exp(z0)
    probs = ez / jnp.sum(ez, axis=1, keepdims=True)                              # (1, C)

    # One lane-dense (T, 128) store: [hiddens(2H) | attn(n_head) | probs(C) | 0]
    pad = jnp.zeros((T, GB - D - n_head - n_class), dtype=jnp.float32)
    out_ref[...] = jnp.concatenate(
        [Hs, A, jnp.broadcast_to(probs, (T, n_class)), pad], axis=1)


# ----------------------------------------------------------------------------
# Parameter packing (host side; in deployment this runs once, not per call)
# ----------------------------------------------------------------------------
def pack_params(gru_params, ws1, ws2, wout_flat, bout, *, E, H, DA, n_head, n_class):
    wf_ih, wf_hh, bf_ih, bf_hh, wb_ih, wb_hh, bb_ih, bb_hh = gru_params
    D = 2 * H
    L = _layout(E, H, DA, n_head, n_class)
    slab = jnp.zeros((L['rows'], 3 * GB), jnp.float32)

    for k in range(3):                      # gate order r, z, n (PyTorch GRU)
        c = k * GB
        gf = slice(k * H, (k + 1) * H)
        # input->hidden: fwd weights drive fwd gate columns, bwd rows drive bwd columns
        slab = slab.at[L['wih'] + 0:L['wih'] + E, c:c + H].set(wf_ih[:, gf])
        slab = slab.at[L['wih'] + E:L['wih'] + 2 * E, c + H:c + 2 * H].set(wb_ih[:, gf])
        # hidden->hidden: block-diagonal over direction, pad rows [2H, GB) stay zero
        slab = slab.at[L['whh'] + 0:L['whh'] + H, c:c + H].set(wf_hh[:, gf])
        slab = slab.at[L['whh'] + H:L['whh'] + 2 * H, c + H:c + 2 * H].set(wb_hh[:, gf])
        # biases
        slab = slab.at[L['bih'], c:c + H].set(bf_ih[0, gf])
        slab = slab.at[L['bih'], c + H:c + 2 * H].set(bb_ih[0, gf])
        slab = slab.at[L['bhh'], c:c + H].set(bf_hh[0, gf])
        slab = slab.at[L['bhh'], c + H:c + 2 * H].set(bb_hh[0, gf])

    slab = slab.at[L['ws1']:L['ws1'] + D, 0:DA].set(ws1)
    slab = slab.at[L['ws2']:L['ws2'] + DA, 0:n_head].set(ws2)
    slab = slab.at[L['wout']:L['wout'] + n_head * D, 0:n_class].set(wout_flat)
    slab = slab.at[L['bout'], 0:n_class].set(bout[0])
    return slab


# ----------------------------------------------------------------------------
# Wrapper (run under one jax.jit: pack + kernel + argmax = one dispatch)
# ----------------------------------------------------------------------------
def sentence_classifier_forward(x, gru_params, ws1, ws2, wout_flat, bout, *,
                                hidden_dim, attn_dim, n_head, n_class):
    T, E = x.shape
    H = hidden_dim
    D = 2 * H
    # TODO(synk): tokenizer / word2vec embedding lookup and the attention
    # visualisation callback stay outside the kernel.

    slab = pack_params(gru_params, ws1, ws2, wout_flat, bout,
                       E=E, H=H, DA=attn_dim, n_head=n_head, n_class=n_class)
    # Host-side direction mixing: x_cat[t] = [x[t] | x[T-1-t]] so the kernel's
    # single input projection yields fwd AND bwd gate pre-activations.
    x_cat = jnp.concatenate([x, x[::-1, :]], axis=1)                  # (T, 2E)

    vmem = pl.BlockSpec(memory_space=pltpu.MemorySpace.VMEM)
    out = pl.pallas_call(
        functools.partial(sentence_classifier_kernel, T=T, E=E, H=H,
                          DA=attn_dim, n_head=n_head, n_class=n_class),
        out_shape=jax.ShapeDtypeStruct((T, GB), jnp.float32),
        in_specs=[vmem, vmem],
        out_specs=vmem,
    )(x_cat, slab)

    hiddens = out[:, 0:D]                                  # (T, 2H)
    attn = out[:, D:D + n_head].T                          # (n_head, T) visualisation layout
    probs = out[0:1, D + n_head:D + n_head + n_class]      # (1, n_class)
    pred = jnp.argmax(probs, axis=1)[0]                    # out.data.topk(1)[1].item()
    return pred, probs, attn, hiddens


# ----------------------------------------------------------------------------
# Pure-JAX reference (correctness check)
# ----------------------------------------------------------------------------
def reference_forward(x, gru_params, ws1, ws2, wout_flat, bout, H):
    wf_ih, wf_hh, bf_ih, bf_hh, wb_ih, wb_hh, bb_ih, bb_hh = gru_params

    def gru_dir(w_ih, w_hh, b_ih, b_hh, xs):
        def step(h, x_t):
            gx = x_t @ w_ih + b_ih
            gh = h @ w_hh + b_hh
            r = jax.nn.sigmoid(gx[:, :H] + gh[:, :H])
            z = jax.nn.sigmoid(gx[:, H:2 * H] + gh[:, H:2 * H])
            n = jnp.tanh(gx[:, 2 * H:] + r * gh[:, 2 * H:])
            h_new = (1.0 - z) * n + z * h
            return h_new, h_new[0]
        h0 = jnp.zeros((1, H), jnp.float32)
        _, hs = lax.scan(step, h0, xs[:, None, :])
        return hs                                   # (T, H)

    hf = gru_dir(wf_ih, wf_hh, bf_ih, bf_hh, x)
    hb = gru_dir(wb_ih, wb_hh, bb_ih, bb_hh, x[::-1])[::-1]
    Hs = jnp.concatenate([hf, hb], axis=1)          # (T, 2H)
    u = jnp.tanh(Hs @ ws1)
    A = jax.nn.softmax(u @ ws2, axis=0)             # (T, n_head)
    M = A.T @ Hs                                    # (n_head, 2H)
    logits = M.reshape(1, -1) @ wout_flat + bout
    probs = jax.nn.softmax(logits, axis=1)
    return probs, A.T, Hs


# ----------------------------------------------------------------------------
# Main
# ----------------------------------------------------------------------------
if __name__ == "__main__":
    T = 8            # sentence length (number of tokens)
    E = 32           # word2vec.out_dim (embedding dim)
    HID = 32         # hidden_dim of the bidirectional GRU
    D = 2 * HID      # context.out_dim (bidirectional)
    DA = 16          # internal attention dim of MultiHeadSelfAttention
    N_HEAD = 2       # n_head
    N_CLASS = 2      # n_class

    key = jax.random.PRNGKey(0)
    ks = jax.random.split(key, 16)

    def rnd(k, shape, scale=0.1):
        return (scale * jax.random.normal(k, shape)).astype(jnp.float32)

    # Input embeddings (stands in for word2vec(tokenize(sentence))).
    x = rnd(ks[0], (T, E), scale=1.0)

    # Bidirectional GRU parameters (stored transposed: x @ W form; gates [r|z|n]).
    gru_params = (
        rnd(ks[1], (E, 3 * HID)),    # W_ih forward
        rnd(ks[2], (HID, 3 * HID)),  # W_hh forward
        rnd(ks[3], (1, 3 * HID)),    # b_ih forward
        rnd(ks[4], (1, 3 * HID)),    # b_hh forward
        rnd(ks[5], (E, 3 * HID)),    # W_ih backward
        rnd(ks[6], (HID, 3 * HID)),  # W_hh backward
        rnd(ks[7], (1, 3 * HID)),    # b_ih backward
        rnd(ks[8], (1, 3 * HID)),    # b_hh backward
    )

    # Self-attention parameters (Lin et al.: A = softmax(Ws2 tanh(Ws1 H^T))).
    ws1 = rnd(ks[9], (D, DA))
    ws2 = rnd(ks[10], (DA, N_HEAD))

    # Output linear: Linear(n_head * D, n_class) in x @ W form.
    wout = rnd(ks[11], (N_HEAD * D, N_CLASS))
    bout = rnd(ks[12], (1, N_CLASS))

    forward = jax.jit(functools.partial(
        sentence_classifier_forward,
        hidden_dim=HID, attn_dim=DA, n_head=N_HEAD, n_class=N_CLASS))

    pred, probs, attn, hiddens = forward(x, gru_params, ws1, ws2, wout, bout)

    pred = jax.block_until_ready(pred)
    probs = jax.block_until_ready(probs)
    attn = jax.block_until_ready(attn)
    hiddens = jax.block_until_ready(hiddens)

    # Shape / sanity checks.
    assert hiddens.shape == (T, D)
    assert probs.shape == (1, N_CLASS)
    assert attn.shape == (N_HEAD, T)
    assert bool(jnp.all(jnp.isfinite(probs)))
    assert abs(float(jnp.sum(probs)) - 1.0) < 1e-3
    assert bool(jnp.all(jnp.abs(jnp.sum(attn, axis=1) - 1.0) < 1e-3))

    # Numerical check against a pure-JAX reference.
    ref_probs, ref_attn, ref_hiddens = reference_forward(
        x, gru_params, ws1, ws2, wout, bout, HID)
    assert float(jnp.max(jnp.abs(hiddens - ref_hiddens))) < 2e-3
    assert float(jnp.max(jnp.abs(attn - ref_attn))) < 2e-3
    assert float(jnp.max(jnp.abs(probs - ref_probs))) < 2e-3
    assert int(pred) == int(jnp.argmax(ref_probs, axis=1)[0])

    print("KERNEL_OK")
</pallas_src>

<mosaic_0001>
module attributes {stable_mosaic.version = 11 : i64} {
  func.func @sentence_classifier_kernel(%arg0: memref<8x64xf32, #tpu.memory_space<vmem>>, %arg1: memref<416x384xf32, #tpu.memory_space<vmem>>, %arg2: memref<8x128xf32, #tpu.memory_space<vmem>>) attributes {dimension_semantics = [], scalar_prefetch = 0 : i64, scratch_operands = 0 : i64, tpu.core_type = #tpu.core_type<tc>} {
    %c0 = arith.constant 0 : index
    %c0_0 = arith.constant 0 : index
    %0 = vector.load %arg1[%c0, %c0_0] : memref<416x384xf32, #tpu.memory_space<vmem>>, vector<64x384xf32>
    %c64 = arith.constant 64 : index
    %c0_1 = arith.constant 0 : index
    %1 = vector.load %arg1[%c64, %c0_1] : memref<416x384xf32, #tpu.memory_space<vmem>>, vector<128x384xf32>
    %c192 = arith.constant 192 : index
    %c0_2 = arith.constant 0 : index
    %2 = vector.load %arg1[%c192, %c0_2] : memref<416x384xf32, #tpu.memory_space<vmem>>, vector<1x384xf32>
    %c193 = arith.constant 193 : index
    %c0_3 = arith.constant 0 : index
    %3 = vector.load %arg1[%c193, %c0_3] : memref<416x384xf32, #tpu.memory_space<vmem>>, vector<1x384xf32>
    %c0_4 = arith.constant 0 : index
    %c0_5 = arith.constant 0 : index
    %4 = vector.load %arg0[%c0_4, %c0_5] : memref<8x64xf32, #tpu.memory_space<vmem>>, vector<8x64xf32>
    %cst = arith.constant dense<0.000000e+00> : vector<8x384xf32>
    %5 = tpu.matmul %4, %0, %cst {dimension_numbers = #tpu.dot_dimension_numbers<[1], [0], [0], [1], [0, 0, 1, 1], [], []>} : vector<8x64xf32>, vector<64x384xf32>, vector<8x384xf32> -> vector<8x384xf32>
    %6 = vector.broadcast %2 : vector<1x384xf32> to vector<8x384xf32>
    %7 = arith.addf %5, %6 : vector<8x384xf32>
    %cst_6 = arith.constant 0.000000e+00 : f32
    %8 = vector.broadcast %cst_6 : f32 to vector<1x128xf32>
    %9 = vector.extract_strided_slice %7 {offsets = [0, 0], sizes = [1, 384], strides = [1, 1]} : vector<8x384xf32> to vector<1x384xf32>
    %cst_7 = arith.constant dense<0.000000e+00> : vector<1x384xf32>
    %10 = tpu.matmul %8, %1, %cst_7 {dimension_numbers = #tpu.dot_dimension_numbers<[1], [0], [0], [1], [0, 0, 1, 1], [], []>} : vector<1x128xf32>, vector<128x384xf32>, vector<1x384xf32> -> vector<1x384xf32>
    %11 = arith.addf %10, %3 : vector<1x384xf32>
    %12 = vector.extract_strided_slice %9 {offsets = [0, 0], sizes = [1, 128], strides = [1, 1]} : vector<1x384xf32> to vector<1x128xf32>
    %13 = vector.extract_strided_slice %11 {offsets = [0, 0], sizes = [1, 128], strides = [1, 1]} : vector<1x384xf32> to vector<1x128xf32>
    %14 = arith.addf %12, %13 : vector<1x128xf32>
    %15 = arith.negf %14 : vector<1x128xf32>
    %16 = math.exp %15 : vector<1x128xf32>
    %cst_8 = arith.constant 1.000000e+00 : f32
    %17 = vector.broadcast %cst_8 : f32 to vector<1x128xf32>
    %18 = arith.addf %17, %16 : vector<1x128xf32>
    %19 = arith.divf %17, %18 : vector<1x128xf32>
    %20 = vector.extract_strided_slice %9 {offsets = [0, 128], sizes = [1, 128], strides = [1, 1]} : vector<1x384xf32> to vector<1x128xf32>
    %21 = vector.extract_strided_slice %11 {offsets = [0, 128], sizes = [1, 128], strides = [1, 1]} : vector<1x384xf32> to vector<1x128xf32>
    %22 = arith.addf %20, %21 : vector<1x128xf32>
    %23 = arith.negf %22 : vector<1x128xf32>
    %24 = math.exp %23 : vector<1x128xf32>
    %cst_9 = arith.constant 1.000000e+00 : f32
    %25 = vector.broadcast %cst_9 : f32 to vector<1x128xf32>
    %26 = arith.addf %25, %24 : vector<1x128xf32>
    %27 = arith.divf %25, %26 : vector<1x128xf32>
    %28 = vector.extract_strided_slice %9 {offsets = [0, 256], sizes = [1, 128], strides = [1, 1]} : vector<1x384xf32> to vector<1x128xf32>
    %29 = vector.extract_strided_slice %11 {offsets = [0, 256], sizes = [1, 128], strides = [1, 1]} : vector<1x384xf32> to vector<1x128xf32>
    %30 = arith.mulf %19, %29 : vector<1x128xf32>
    %31 = arith.addf %28, %30 : vector<1x128xf32>
    %32 = math.tanh %31 : vector<1x128xf32>
    %cst_10 = arith.constant 1.000000e+00 : f32
    %33 = vector.broadcast %cst_10 : f32 to vector<1x128xf32>
    %34 = arith.subf %33, %27 : vector<1x128xf32>
    %35 = arith.mulf %34, %32 : vector<1x128xf32>
    %36 = arith.mulf %27, %8 : vector<1x128xf32>
    %37 = arith.addf %35, %36 : vector<1x128xf32>
    %38 = vector.extract_strided_slice %7 {offsets = [1, 0], sizes = [1, 384], strides = [1, 1]} : vector<8x384xf32> to vector<1x384xf32>
    %cst_11 = arith.constant dense<0.000000e+00> : vector<1x384xf32>
    %39 = tpu.matmul %37, %1, %cst_11 {dimension_numbers = #tpu.dot_dimension_numbers<[1], [0], [0], [1], [0, 0, 1, 1], [], []>} : vector<1x128xf32>, vector<128x384xf32>, vector<1x384xf32> -> vector<1x384xf32>
    %40 = arith.addf %39, %3 : vector<1x384xf32>
    %41 = vector.extract_strided_slice %38 {offsets = [0, 0], sizes = [1, 128], strides = [1, 1]} : vector<1x384xf32> to vector<1x128xf32>
    %42 = vector.extract_strided_slice %40 {offsets = [0, 0], sizes = [1, 128], strides = [1, 1]} : vector<1x384xf32> to vector<1x128xf32>
    %43 = arith.addf %41, %42 : vector<1x128xf32>
    %44 = arith.negf %43 : vector<1x128xf32>
    %45 = math.exp %44 : vector<1x128xf32>
    %cst_12 = arith.constant 1.000000e+00 : f32
    %46 = vector.broadcast %cst_12 : f32 to vector<1x128xf32>
    %47 = arith.addf %46, %45 : vector<1x128xf32>
    %48 = arith.divf %46, %47 : vector<1x128xf32>
    %49 = vector.extract_strided_slice %38 {offsets = [0, 128], sizes = [1, 128], strides = [1, 1]} : vector<1x384xf32> to vector<1x128xf32>
    %50 = vector.extract_strided_slice %40 {offsets = [0, 128], sizes = [1, 128], strides = [1, 1]} : vector<1x384xf32> to vector<1x128xf32>
    %51 = arith.addf %49, %50 : vector<1x128xf32>
    %52 = arith.negf %51 : vector<1x128xf32>
    %53 = math.exp %52 : vector<1x128xf32>
    %cst_13 = arith.constant 1.000000e+00 : f32
    %54 = vector.broadcast %cst_13 : f32 to vector<1x128xf32>
    %55 = arith.addf %54, %53 : vector<1x128xf32>
    %56 = arith.divf %54, %55 : vector<1x128xf32>
    %57 = vector.extract_strided_slice %38 {offsets = [0, 256], sizes = [1, 128], strides = [1, 1]} : vector<1x384xf32> to vector<1x128xf32>
    %58 = vector.extract_strided_slice %40 {offsets = [0, 256], sizes = [1, 128], strides = [1, 1]} : vector<1x384xf32> to vector<1x128xf32>
    %59 = arith.mulf %48, %58 : vector<1x128xf32>
    %60 = arith.addf %57, %59 : vector<1x128xf32>
    %61 = math.tanh %60 : vector<1x128xf32>
    %cst_14 = arith.constant 1.000000e+00 : f32
    %62 = vector.broadcast %cst_14 : f32 to vector<1x128xf32>
    %63 = arith.subf %62, %56 : vector<1x128xf32>
    %64 = arith.mulf %63, %61 : vector<1x128xf32>
    %65 = arith.mulf %56, %37 : vector<1x128xf32>
    %66 = arith.addf %64, %65 : vector<1x128xf32>
    %67 = vector.extract_strided_slice %7 {offsets = [2, 0], sizes = [1, 384], strides = [1, 1]} : vector<8x384xf32> to vector<1x384xf32>
    %cst_15 = arith.constant dense<0.000000e+00> : vector<1x384xf32>
    %68 = tpu.matmul %66, %1, %cst_15 {dimension_numbers = #tpu.dot_dimension_numbers<[1], [0], [0], [1], [0, 0, 1, 1], [], []>} : vector<1x128xf32>, vector<128x384xf32>, vector<1x384xf32> -> vector<1x384xf32>
    %69 = arith.addf %68, %3 : vector<1x384xf32>
    %70 = vector.extract_strided_slice %67 {offsets = [0, 0], sizes = [1, 128], strides = [1, 1]} : vector<1x384xf32> to vector<1x128xf32>
    %71 = vector.extract_strided_slice %69 {offsets = [0, 0], sizes = [1, 128], strides = [1, 1]} : vector<1x384xf32> to vector<1x128xf32>
    %72 = arith.addf %70, %71 : vector<1x128xf32>
    %73 = arith.negf %72 : vector<1x128xf32>
    %74 = math.exp %73 : vector<1x128xf32>
    %cst_16 = arith.constant 1.000000e+00 : f32
    %75 = vector.broadcast %cst_16 : f32 to vector<1x128xf32>
    %76 = arith.addf %75, %74 : vector<1x128xf32>
    %77 = arith.divf %75, %76 : vector<1x128xf32>
    %78 = vector.extract_strided_slice %67 {offsets = [0, 128], sizes = [1, 128], strides = [1, 1]} : vector<1x384xf32> to vector<1x128xf32>
    %79 = vector.extract_strided_slice %69 {offsets = [0, 128], sizes = [1, 128], strides = [1, 1]} : vector<1x384xf32> to vector<1x128xf32>
    %80 = arith.addf %78, %79 : vector<1x128xf32>
    %81 = arith.negf %80 : vector<1x128xf32>
    %82 = math.exp %81 : vector<1x128xf32>
    %cst_17 = arith.constant 1.000000e+00 : f32
    %83 = vector.broadcast %cst_17 : f32 to vector<1x128xf32>
    %84 = arith.addf %83, %82 : vector<1x128xf32>
    %85 = arith.divf %83, %84 : vector<1x128xf32>
    %86 = vector.extract_strided_slice %67 {offsets = [0, 256], sizes = [1, 128], strides = [1, 1]} : vector<1x384xf32> to vector<1x128xf32>
    %87 = vector.extract_strided_slice %69 {offsets = [0, 256], sizes = [1, 128], strides = [1, 1]} : vector<1x384xf32> to vector<1x128xf32>
    %88 = arith.mulf %77, %87 : vector<1x128xf32>
    %89 = arith.addf %86, %88 : vector<1x128xf32>
    %90 = math.tanh %89 : vector<1x128xf32>
    %cst_18 = arith.constant 1.000000e+00 : f32
    %91 = vector.broadcast %cst_18 : f32 to vector<1x128xf32>
    %92 = arith.subf %91, %85 : vector<1x128xf32>
    %93 = arith.mulf %92, %90 : vector<1x128xf32>
    %94 = arith.mulf %85, %66 : vector<1x128xf32>
    %95 = arith.addf %93, %94 : vector<1x128xf32>
    %96 = vector.extract_strided_slice %7 {offsets = [3, 0], sizes = [1, 384], strides = [1, 1]} : vector<8x384xf32> to vector<1x384xf32>
    %cst_19 = arith.constant dense<0.000000e+00> : vector<1x384xf32>
    %97 = tpu.matmul %95, %1, %cst_19 {dimension_numbers = #tpu.dot_dimension_numbers<[1], [0], [0], [1], [0, 0, 1, 1], [], []>} : vector<1x128xf32>, vector<128x384xf32>, vector<1x384xf32> -> vector<1x384xf32>
    %98 = arith.addf %97, %3 : vector<1x384xf32>
    %99 = vector.extract_strided_slice %96 {offsets = [0, 0], sizes = [1, 128], strides = [1, 1]} : vector<1x384xf32> to vector<1x128xf32>
    %100 = vector.extract_strided_slice %98 {offsets = [0, 0], sizes = [1, 128], strides = [1, 1]} : vector<1x384xf32> to vector<1x128xf32>
    %101 = arith.addf %99, %100 : vector<1x128xf32>
    %102 = arith.negf %101 : vector<1x128xf32>
    %103 = math.exp %102 : vector<1x128xf32>
    %cst_20 = arith.constant 1.000000e+00 : f32
    %104 = vector.broadcast %cst_20 : f32 to vector<1x128xf32>
    %105 = arith.addf %104, %103 : vector<1x128xf32>
    %106 = arith.divf %104, %105 : vector<1x128xf32>
    %107 = vector.extract_strided_slice %96 {offsets = [0, 128], sizes = [1, 128], strides = [1, 1]} : vector<1x384xf32> to vector<1x128xf32>
    %108 = vector.extract_strided_slice %98 {offsets = [0, 128], sizes = [1, 128], strides = [1, 1]} : vector<1x384xf32> to vector<1x128xf32>
    %109 = arith.addf %107, %108 : vector<1x128xf32>
    %110 = arith.negf %109 : vector<1x128xf32>
    %111 = math.exp %110 : vector<1x128xf32>
    %cst_21 = arith.constant 1.000000e+00 : f32
    %112 = vector.broadcast %cst_21 : f32 to vector<1x128xf32>
    %113 = arith.addf %112, %111 : vector<1x128xf32>
    %114 = arith.divf %112, %113 : vector<1x128xf32>
    %115 = vector.extract_strided_slice %96 {offsets = [0, 256], sizes = [1, 128], strides = [1, 1]} : vector<1x384xf32> to vector<1x128xf32>
    %116 = vector.extract_strided_slice %98 {offsets = [0, 256], sizes = [1, 128], strides = [1, 1]} : vector<1x384xf32> to vector<1x128xf32>
    %117 = arith.mulf %106, %116 : vector<1x128xf32>
    %118 = arith.addf %115, %117 : vector<1x128xf32>
    %119 = math.tanh %118 : vector<1x128xf32>
    %cst_22 = arith.constant 1.000000e+00 : f32
    %120 = vector.broadcast %cst_22 : f32 to vector<1x128xf32>
    %121 = arith.subf %120, %114 : vector<1x128xf32>
    %122 = arith.mulf %121, %119 : vector<1x128xf32>
    %123 = arith.mulf %114, %95 : vector<1x128xf32>
    %124 = arith.addf %122, %123 : vector<1x128xf32>
    %125 = vector.extract_strided_slice %7 {offsets = [4, 0], sizes = [1, 384], strides = [1, 1]} : vector<8x384xf32> to vector<1x384xf32>
    %cst_23 = arith.constant dense<0.000000e+00> : vector<1x384xf32>
    %126 = tpu.matmul %124, %1, %cst_23 {dimension_numbers = #tpu.dot_dimension_numbers<[1], [0], [0], [1], [0, 0, 1, 1], [], []>} : vector<1x128xf32>, vector<128x384xf32>, vector<1x384xf32> -> vector<1x384xf32>
    %127 = arith.addf %126, %3 : vector<1x384xf32>
    %128 = vector.extract_strided_slice %125 {offsets = [0, 0], sizes = [1, 128], strides = [1, 1]} : vector<1x384xf32> to vector<1x128xf32>
    %129 = vector.extract_strided_slice %127 {offsets = [0, 0], sizes = [1, 128], strides = [1, 1]} : vector<1x384xf32> to vector<1x128xf32>
    %130 = arith.addf %128, %129 : vector<1x128xf32>
    %131 = arith.negf %130 : vector<1x128xf32>
    %132 = math.exp %131 : vector<1x128xf32>
    %cst_24 = arith.constant 1.000000e+00 : f32
    %133 = vector.broadcast %cst_24 : f32 to vector<1x128xf32>
    %134 = arith.addf %133, %132 : vector<1x128xf32>
    %135 = arith.divf %133, %134 : vector<1x128xf32>
    %136 = vector.extract_strided_slice %125 {offsets = [0, 128], sizes = [1, 128], strides = [1, 1]} : vector<1x384xf32> to vector<1x128xf32>
    %137 = vector.extract_strided_slice %127 {offsets = [0, 128], sizes = [1, 128], strides = [1, 1]} : vector<1x384xf32> to vector<1x128xf32>
    %138 = arith.addf %136, %137 : vector<1x128xf32>
    %139 = arith.negf %138 : vector<1x128xf32>
    %140 = math.exp %139 : vector<1x128xf32>
    %cst_25 = arith.constant 1.000000e+00 : f32
    %141 = vector.broadcast %cst_25 : f32 to vector<1x128xf32>
    %142 = arith.addf %141, %140 : vector<1x128xf32>
    %143 = arith.divf %141, %142 : vector<1x128xf32>
    %144 = vector.extract_strided_slice %125 {offsets = [0, 256], sizes = [1, 128], strides = [1, 1]} : vector<1x384xf32> to vector<1x128xf32>
    %145 = vector.extract_strided_slice %127 {offsets = [0, 256], sizes = [1, 128], strides = [1, 1]} : vector<1x384xf32> to vector<1x128xf32>
    %146 = arith.mulf %135, %145 : vector<1x128xf32>
    %147 = arith.addf %144, %146 : vector<1x128xf32>
    %148 = math.tanh %147 : vector<1x128xf32>
    %cst_26 = arith.constant 1.000000e+00 : f32
    %149 = vector.broadcast %cst_26 : f32 to vector<1x128xf32>
    %150 = arith.subf %149, %143 : vector<1x128xf32>
    %151 = arith.mulf %150, %148 : vector<1x128xf32>
    %152 = arith.mulf %143, %124 : vector<1x128xf32>
    %153 = arith.addf %151, %152 : vector<1x128xf32>
    %154 = vector.extract_strided_slice %7 {offsets = [5, 0], sizes = [1, 384], strides = [1, 1]} : vector<8x384xf32> to vector<1x384xf32>
    %cst_27 = arith.constant dense<0.000000e+00> : vector<1x384xf32>
    %155 = tpu.matmul %153, %1, %cst_27 {dimension_numbers = #tpu.dot_dimension_numbers<[1], [0], [0], [1], [0, 0, 1, 1], [], []>} : vector<1x128xf32>, vector<128x384xf32>, vector<1x384xf32> -> vector<1x384xf32>
    %156 = arith.addf %155, %3 : vector<1x384xf32>
    %157 = vector.extract_strided_slice %154 {offsets = [0, 0], sizes = [1, 128], strides = [1, 1]} : vector<1x384xf32> to vector<1x128xf32>
    %158 = vector.extract_strided_slice %156 {offsets = [0, 0], sizes = [1, 128], strides = [1, 1]} : vector<1x384xf32> to vector<1x128xf32>
    %159 = arith.addf %157, %158 : vector<1x128xf32>
    %160 = arith.negf %159 : vector<1x128xf32>
    %161 = math.exp %160 : vector<1x128xf32>
    %cst_28 = arith.constant 1.000000e+00 : f32
    %162 = vector.broadcast %cst_28 : f32 to vector<1x128xf32>
    %163 = arith.addf %162, %161 : vector<1x128xf32>
    %164 = arith.divf %162, %163 : vector<1x128xf32>
    %165 = vector.extract_strided_slice %154 {offsets = [0, 128], sizes = [1, 128], strides = [1, 1]} : vector<1x384xf32> to vector<1x128xf32>
    %166 = vector.extract_strided_slice %156 {offsets = [0, 128], sizes = [1, 128], strides = [1, 1]} : vector<1x384xf32> to vector<1x128xf32>
    %167 = arith.addf %165, %166 : vector<1x128xf32>
    %168 = arith.negf %167 : vector<1x128xf32>
    %169 = math.exp %168 : vector<1x128xf32>
    %cst_29 = arith.constant 1.000000e+00 : f32
    %170 = vector.broadcast %cst_29 : f32 to vector<1x128xf32>
    %171 = arith.addf %170, %169 : vector<1x128xf32>
    %172 = arith.divf %170, %171 : vector<1x128xf32>
    %173 = vector.extract_strided_slice %154 {offsets = [0, 256], sizes = [1, 128], strides = [1, 1]} : vector<1x384xf32> to vector<1x128xf32>
    %174 = vector.extract_strided_slice %156 {offsets = [0, 256], sizes = [1, 128], strides = [1, 1]} : vector<1x384xf32> to vector<1x128xf32>
    %175 = arith.mulf %164, %174 : vector<1x128xf32>
    %176 = arith.addf %173, %175 : vector<1x128xf32>
    %177 = math.tanh %176 : vector<1x128xf32>
    %cst_30 = arith.constant 1.000000e+00 : f32
    %178 = vector.broadcast %cst_30 : f32 to vector<1x128xf32>
    %179 = arith.subf %178, %172 : vector<1x128xf32>
    %180 = arith.mulf %179, %177 : vector<1x128xf32>
    %181 = arith.mulf %172, %153 : vector<1x128xf32>
    %182 = arith.addf %180, %181 : vector<1x128xf32>
    %183 = vector.extract_strided_slice %7 {offsets = [6, 0], sizes = [1, 384], strides = [1, 1]} : vector<8x384xf32> to vector<1x384xf32>
    %cst_31 = arith.constant dense<0.000000e+00> : vector<1x384xf32>
    %184 = tpu.matmul %182, %1, %cst_31 {dimension_numbers = #tpu.dot_dimension_numbers<[1], [0], [0], [1], [0, 0, 1, 1], [], []>} : vector<1x128xf32>, vector<128x384xf32>, vector<1x384xf32> -> vector<1x384xf32>
    %185 = arith.addf %184, %3 : vector<1x384xf32>
    %186 = vector.extract_strided_slice %183 {offsets = [0, 0], sizes = [1, 128], strides = [1, 1]} : vector<1x384xf32> to vector<1x128xf32>
    %187 = vector.extract_strided_slice %185 {offsets = [0, 0], sizes = [1, 128], strides = [1, 1]} : vector<1x384xf32> to vector<1x128xf32>
    %188 = arith.addf %186, %187 : vector<1x128xf32>
    %189 = arith.negf %188 : vector<1x128xf32>
    %190 = math.exp %189 : vector<1x128xf32>
    %cst_32 = arith.constant 1.000000e+00 : f32
    %191 = vector.broadcast %cst_32 : f32 to vector<1x128xf32>
    %192 = arith.addf %191, %190 : vector<1x128xf32>
    %193 = arith.divf %191, %192 : vector<1x128xf32>
    %194 = vector.extract_strided_slice %183 {offsets = [0, 128], sizes = [1, 128], strides = [1, 1]} : vector<1x384xf32> to vector<1x128xf32>
    %195 = vector.extract_strided_slice %185 {offsets = [0, 128], sizes = [1, 128], strides = [1, 1]} : vector<1x384xf32> to vector<1x128xf32>
    %196 = arith.addf %194, %195 : vector<1x128xf32>
    %197 = arith.negf %196 : vector<1x128xf32>
    %198 = math.exp %197 : vector<1x128xf32>
    %cst_33 = arith.constant 1.000000e+00 : f32
    %199 = vector.broadcast %cst_33 : f32 to vector<1x128xf32>
    %200 = arith.addf %199, %198 : vector<1x128xf32>
    %201 = arith.divf %199, %200 : vector<1x128xf32>
    %202 = vector.extract_strided_slice %183 {offsets = [0, 256], sizes = [1, 128], strides = [1, 1]} : vector<1x384xf32> to vector<1x128xf32>
    %203 = vector.extract_strided_slice %185 {offsets = [0, 256], sizes = [1, 128], strides = [1, 1]} : vector<1x384xf32> to vector<1x128xf32>
    %204 = arith.mulf %193, %203 : vector<1x128xf32>
    %205 = arith.addf %202, %204 : vector<1x128xf32>
    %206 = math.tanh %205 : vector<1x128xf32>
    %cst_34 = arith.constant 1.000000e+00 : f32
    %207 = vector.broadcast %cst_34 : f32 to vector<1x128xf32>
    %208 = arith.subf %207, %201 : vector<1x128xf32>
    %209 = arith.mulf %208, %206 : vector<1x128xf32>
    %210 = arith.mulf %201, %182 : vector<1x128xf32>
    %211 = arith.addf %209, %210 : vector<1x128xf32>
    %212 = vector.extract_strided_slice %7 {offsets = [7, 0], sizes = [1, 384], strides = [1, 1]} : vector<8x384xf32> to vector<1x384xf32>
    %cst_35 = arith.constant dense<0.000000e+00> : vector<1x384xf32>
    %213 = tpu.matmul %211, %1, %cst_35 {dimension_numbers = #tpu.dot_dimension_numbers<[1], [0], [0], [1], [0, 0, 1, 1], [], []>} : vector<1x128xf32>, vector<128x384xf32>, vector<1x384xf32> -> vector<1x384xf32>
    %214 = arith.addf %213, %3 : vector<1x384xf32>
    %215 = vector.extract_strided_slice %212 {offsets = [0, 0], sizes = [1, 128], strides = [1, 1]} : vector<1x384xf32> to vector<1x128xf32>
    %216 = vector.extract_strided_slice %214 {offsets = [0, 0], sizes = [1, 128], strides = [1, 1]} : vector<1x384xf32> to vector<1x128xf32>
    %217 = arith.addf %215, %216 : vector<1x128xf32>
    %218 = arith.negf %217 : vector<1x128xf32>
    %219 = math.exp %218 : vector<1x128xf32>
    %cst_36 = arith.constant 1.000000e+00 : f32
    %220 = vector.broadcast %cst_36 : f32 to vector<1x128xf32>
    %221 = arith.addf %220, %219 : vector<1x128xf32>
    %222 = arith.divf %220, %221 : vector<1x128xf32>
    %223 = vector.extract_strided_slice %212 {offsets = [0, 128], sizes = [1, 128], strides = [1, 1]} : vector<1x384xf32> to vector<1x128xf32>
    %224 = vector.extract_strided_slice %214 {offsets = [0, 128], sizes = [1, 128], strides = [1, 1]} : vector<1x384xf32> to vector<1x128xf32>
    %225 = arith.addf %223, %224 : vector<1x128xf32>
    %226 = arith.negf %225 : vector<1x128xf32>
    %227 = math.exp %226 : vector<1x128xf32>
    %cst_37 = arith.constant 1.000000e+00 : f32
    %228 = vector.broadcast %cst_37 : f32 to vector<1x128xf32>
    %229 = arith.addf %228, %227 : vector<1x128xf32>
    %230 = arith.divf %228, %229 : vector<1x128xf32>
    %231 = vector.extract_strided_slice %212 {offsets = [0, 256], sizes = [1, 128], strides = [1, 1]} : vector<1x384xf32> to vector<1x128xf32>
    %232 = vector.extract_strided_slice %214 {offsets = [0, 256], sizes = [1, 128], strides = [1, 1]} : vector<1x384xf32> to vector<1x128xf32>
    %233 = arith.mulf %222, %232 : vector<1x128xf32>
    %234 = arith.addf %231, %233 : vector<1x128xf32>
    %235 = math.tanh %234 : vector<1x128xf32>
    %cst_38 = arith.constant 1.000000e+00 : f32
    %236 = vector.broadcast %cst_38 : f32 to vector<1x128xf32>
    %237 = arith.subf %236, %230 : vector<1x128xf32>
    %238 = arith.mulf %237, %235 : vector<1x128xf32>
    %239 = arith.mulf %230, %211 : vector<1x128xf32>
    %240 = arith.addf %238, %239 : vector<1x128xf32>
    %241 = tpu.concatenate %37, %66, %95, %124, %153, %182, %211, %240 in 0 : vector<1x128xf32>, vector<1x128xf32>, vector<1x128xf32>, vector<1x128xf32>, vector<1x128xf32>, vector<1x128xf32>, vector<1x128xf32>, vector<1x128xf32> -> vector<8x128xf32>
    %242 = vector.extract_strided_slice %241 {offsets = [0, 0], sizes = [8, 32], strides = [1, 1]} : vector<8x128xf32> to vector<8x32xf32>
    %243 = tpu.concatenate %240, %211, %182, %153, %124, %95, %66, %37 in 0 : vector<1x128xf32>, vector<1x128xf32>, vector<1x128xf32>, vector<1x128xf32>, vector<1x128xf32>, vector<1x128xf32>, vector<1x128xf32>, vector<1x128xf32> -> vector<8x128xf32>
    %244 = vector.extract_strided_slice %243 {offsets = [0, 32], sizes = [8, 32], strides = [1, 1]} : vector<8x128xf32> to vector<8x32xf32>
    %245 = tpu.concatenate %242, %244 in 1 : vector<8x32xf32>, vector<8x32xf32> -> vector<8x64xf32>
    %c200 = arith.constant 200 : index
    %c0_39 = arith.constant 0 : index
    %246 = vector.load %arg1[%c200, %c0_39] : memref<416x384xf32, #tpu.memory_space<vmem>>, vector<64x16xf32>
    %c264 = arith.constant 264 : index
    %c0_40 = arith.constant 0 : index
    %247 = vector.load %arg1[%c264, %c0_40] : memref<416x384xf32, #tpu.memory_space<vmem>>, vector<16x2xf32>
    %c280 = arith.constant 280 : index
    %c0_41 = arith.constant 0 : index
    %248 = vector.load %arg1[%c280, %c0_41] : memref<416x384xf32, #tpu.memory_space<vmem>>, vector<128x2xf32>
    %c408 = arith.constant 408 : index
    %c0_42 = arith.constant 0 : index
    %249 = vector.load %arg1[%c408, %c0_42] : memref<416x384xf32, #tpu.memory_space<vmem>>, vector<1x2xf32>
    %cst_43 = arith.constant dense<0.000000e+00> : vector<8x16xf32>
    %250 = tpu.matmul %245, %246, %cst_43 {dimension_numbers = #tpu.dot_dimension_numbers<[1], [0], [0], [1], [0, 0, 1, 1], [], []>} : vector<8x64xf32>, vector<64x16xf32>, vector<8x16xf32> -> vector<8x16xf32>
    %251 = math.tanh %250 : vector<8x16xf32>
    %cst_44 = arith.constant dense<0.000000e+00> : vector<8x2xf32>
    %252 = tpu.matmul %251, %247, %cst_44 {dimension_numbers = #tpu.dot_dimension_numbers<[1], [0], [0], [1], [0, 0, 1, 1], [], []>} : vector<8x16xf32>, vector<16x2xf32>, vector<8x2xf32> -> vector<8x2xf32>
    %cst_45 = arith.constant dense<0xFF800000> : vector<2xf32>
    %253 = vector.multi_reduction <maximumf>, %252, %cst_45 [0] : vector<8x2xf32> to vector<2xf32>
    %254 = vector.shape_cast %253 : vector<2xf32> to vector<1x2xf32>
    %255 = vector.broadcast %254 : vector<1x2xf32> to vector<8x2xf32>
    %256 = arith.subf %252, %255 : vector<8x2xf32>
    %257 = math.exp %256 : vector<8x2xf32>
    %cst_46 = arith.constant dense<0.000000e+00> : vector<2xf32>
    %258 = vector.multi_reduction <add>, %257, %cst_46 [0] : vector<8x2xf32> to vector<2xf32>
    %259 = vector.shape_cast %258 : vector<2xf32> to vector<1x2xf32>
    %260 = vector.broadcast %259 : vector<1x2xf32> to vector<8x2xf32>
    %261 = arith.divf %257, %260 : vector<8x2xf32>
    %262 = vector.extract_strided_slice %261 {offsets = [0, 0], sizes = [8, 1], strides = [1, 1]} : vector<8x2xf32> to vector<8x1xf32>
    %263 = vector.shape_cast %262 : vector<8x1xf32> to vector<8x1xf32>
    %264 = vector.broadcast %263 : vector<8x1xf32> to vector<8x64xf32>
    %265 = vector.extract_strided_slice %261 {offsets = [0, 1], sizes = [8, 1], strides = [1, 1]} : vector<8x2xf32> to vector<8x1xf32>
    %266 = vector.shape_cast %265 : vector<8x1xf32> to vector<8x1xf32>
    %267 = vector.broadcast %266 : vector<8x1xf32> to vector<8x64xf32>
    %268 = tpu.concatenate %264, %267 in 1 : vector<8x64xf32>, vector<8x64xf32> -> vector<8x128xf32>
    %269 = tpu.concatenate %245, %245 in 1 : vector<8x64xf32>, vector<8x64xf32> -> vector<8x128xf32>
    %270 = arith.mulf %268, %269 : vector<8x128xf32>
    %cst_47 = arith.constant dense<0.000000e+00> : vector<128xf32>
    %271 = vector.multi_reduction <add>, %270, %cst_47 [0] : vector<8x128xf32> to vector<128xf32>
    %272 = vector.shape_cast %271 : vector<128xf32> to vector<1x128xf32>
    %cst_48 = arith.constant dense<0.000000e+00> : vector<1x2xf32>
    %273 = tpu.matmul %272, %248, %cst_48 {dimension_numbers = #tpu.dot_dimension_numbers<[1], [0], [0], [1], [0, 0, 1, 1], [], []>} : vector<1x128xf32>, vector<128x2xf32>, vector<1x2xf32> -> vector<1x2xf32>
    %274 = arith.addf %273, %249 : vector<1x2xf32>
    %cst_49 = arith.constant dense<0xFF800000> : vector<1xf32>
    %275 = vector.multi_reduction <maximumf>, %274, %cst_49 [1] : vector<1x2xf32> to vector<1xf32>
    %276 = vector.shape_cast %275 : vector<1xf32> to vector<1x1xf32>
    %277 = vector.broadcast %276 : vector<1x1xf32> to vector<1x2xf32>
    %278 = arith.subf %274, %277 : vector<1x2xf32>
    %279 = math.exp %278 : vector<1x2xf32>
    %cst_50 = arith.constant dense<0.000000e+00> : vector<1xf32>
    %280 = vector.multi_reduction <add>, %279, %cst_50 [1] : vector<1x2xf32> to vector<1xf32>
    %281 = vector.shape_cast %280 : vector<1xf32> to vector<1x1xf32>
    %282 = vector.broadcast %281 : vector<1x1xf32> to vector<1x2xf32>
    %283 = arith.divf %279, %282 : vector<1x2xf32>
    %cst_51 = arith.constant 0.000000e+00 : f32
    %284 = vector.broadcast %cst_51 : f32 to vector<8x60xf32>
    %285 = vector.shape_cast %283 : vector<1x2xf32> to vector<1x2xf32>
    %286 = vector.broadcast %285 : vector<1x2xf32> to vector<8x2xf32>
    %287 = tpu.concatenate %245, %261, %286, %284 in 1 : vector<8x64xf32>, vector<8x2xf32>, vector<8x2xf32>, vector<8x60xf32> -> vector<8x128xf32>
    %c0_52 = arith.constant 0 : index
    %c0_53 = arith.constant 0 : index
    %288 = vector.load %arg2[%c0_52, %c0_53] : memref<8x128xf32, #tpu.memory_space<vmem>>, vector<8x128xf32>
    tpu.vector_store %arg2[%c0_52, %c0_53], %287 {strides = array<i32>} : memref<8x128xf32, #tpu.memory_space<vmem>>, vector<8x128xf32>,
    return
  }
}

</mosaic_0001>

<llo_original>
// kernel: sentence_classifier_forward.1
$region0: #{sentence_classifier_forward.1}
  #allocation0 [shape = 'u32[]', space=smem, size = 0x4, offset = 0x4, fixed_abs, tag = 'smem constant byte address 0x4 - core index']
  #allocation1 [shape = 'u32[72,128]{1,0:T(1,128)}', space=vmem, size = 0x9000, scoped, tag = 'internal scratch']
  %s0 = inlined_call_operand.vmem [shape: f32[8,64], index: 0, kind: input, shape index: {}]
  %s1 = inlined_call_operand.vmem [shape: f32[416,384], index: 1, kind: input, shape index: {}]
  %s2 = inlined_call_operand.vmem [shape: f32[8,128], index: 2, kind: output, shape index: {}]
  %s3 = sld [smem:[#allocation0]]
  $region18: #{sentence_classifier_forward.1} parent=0
    _
  %s5 = ssub.s32 1, %s3
  %s6 = scalar_select 0, %s5, %s3
  // Predicated region
  $region2: #{sentence_classifier_forward.1} parent=0 // pred_check
    _
  $region3: #{sentence_classifier_forward.1} parent=0 // pred_check_branch
    %8 = sbr.rel (0) target = $region5
  $region4: #{sentence_classifier_forward.1} parent=0 // pred_region
    _
  $region5: #{sentence_classifier_forward.1} parent=0 // pred_fallthru
    _
  // Predicated region
  $region6: #{sentence_classifier_forward.1} parent=0 // pred_check
    _
  $region7: #{sentence_classifier_forward.1} parent=0 // pred_check_branch
    %10 = sbr.rel (0) target = $region9
  $region8: #{sentence_classifier_forward.1} parent=0 // pred_region
    _
  $region9: #{sentence_classifier_forward.1} parent=0 // pred_fallthru
    _
  %v11 = vld [vmem:[%s1] sm:$0xff]
  %v12 = vld [vmem:[%s1 + $0x8] sm:$0xff]
  %v13 = vld [vmem:[%s1 + $0x10] sm:$0xff]
  %v14 = vld [vmem:[%s1 + $0x18] sm:$0xff]
  %v15 = vld [vmem:[%s1 + $0x20] sm:$0xff]
  %v16 = vld [vmem:[%s1 + $0x28] sm:$0xff]
  %v17 = vld [vmem:[%s1 + $0x30] sm:$0xff]
  %v18 = vld [vmem:[%s1 + $0x38] sm:$0xff]
  %v19 = vld [vmem:[%s1 + $0x40] sm:$0xff]
  %v20 = vld [vmem:[%s1 + $0x48] sm:$0xff]
  %v21 = vld [vmem:[%s1 + $0x50] sm:$0xff]
  %v22 = vld [vmem:[%s1 + $0x58] sm:$0xff]
  %v23 = vld [vmem:[%s1 + $0x60] sm:$0xff]
  %v24 = vld [vmem:[%s1 + $0x68] sm:$0xff]
  %v25 = vld [vmem:[%s1 + $0x70] sm:$0xff]
  %v26 = vld [vmem:[%s1 + $0x78] sm:$0xff]
  %v27 = vld [vmem:[%s1 + $0x80] sm:$0xff]
  %v28 = vld [vmem:[%s1 + $0x88] sm:$0xff]
  %v29 = vld [vmem:[%s1 + $0x90] sm:$0xff]
  %v30 = vld [vmem:[%s1 + $0x98] sm:$0xff]
  %v31 = vld [vmem:[%s1 + $0xa0] sm:$0xff]
  %v32 = vld [vmem:[%s1 + $0xa8] sm:$0xff]
  %v33 = vld [vmem:[%s1 + $0xb0] sm:$0xff]
  %v34 = vld [vmem:[%s1 + $0xb8] sm:$0xff]
  %v35 = vld [vmem:[%s1 + $0xc0] sm:$0xff]
  %v36 = vld [vmem:[%s1 + $0xc8] sm:$0xff]
  %v37 = vld [vmem:[%s1 + $0xd0] sm:$0xff]
  %v38 = vld [vmem:[%s1 + $0xd8] sm:$0xff]
  %v39 = vld [vmem:[%s1 + $0xe0] sm:$0xff]
  %v40 = vld [vmem:[%s1 + $0xe8] sm:$0xff]
  %v41 = vld [vmem:[%s1 + $0xf0] sm:$0xff]
  %v42 = vld [vmem:[%s1 + $0xf8] sm:$0xff]
  %v43 = vld [vmem:[%s1 + $0x100] sm:$0xff]
  %v44 = vld [vmem:[%s1 + $0x108] sm:$0xff]
  %v45 = vld [vmem:[%s1 + $0x110] sm:$0xff]
  %v46 = vld [vmem:[%s1 + $0x118] sm:$0xff]
  %v47 = vld [vmem:[%s1 + $0x120] sm:$0xff]
  %v48 = vld [vmem:[%s1 + $0x128] sm:$0xff]
  %v49 = vld [vmem:[%s1 + $0x130] sm:$0xff]
  %v50 = vld [vmem:[%s1 + $0x138] sm:$0xff]
  %v51 = vld [vmem:[%s1 + $0x140] sm:$0xff]
  %v52 = vld [vmem:[%s1 + $0x148] sm:$0xff]
  %v53 = vld [vmem:[%s1 + $0x150] sm:$0xff]
  %v54 = vld [vmem:[%s1 + $0x158] sm:$0xff]
  %v55 = vld [vmem:[%s1 + $0x160] sm:$0xff]
  %v56 = vld [vmem:[%s1 + $0x168] sm:$0xff]
  %v57 = vld [vmem:[%s1 + $0x170] sm:$0xff]
  %v58 = vld [vmem:[%s1 + $0x178] sm:$0xff]
  %v59 = vld [vmem:[%s1 + $0x180] sm:$0xff]
  %v60 = vld [vmem:[%s1 + $0x188] sm:$0xff]
  %v61 = vld [vmem:[%s1 + $0x190] sm:$0xff]
  %v62 = vld [vmem:[%s1 + $0x198] sm:$0xff]
  %v63 = vld [vmem:[%s1 + $0x1a0] sm:$0xff]
  %v64 = vld [vmem:[%s1 + $0x1a8] sm:$0xff]
  %v65 = vld [vmem:[%s1 + $0x1b0] sm:$0xff]
  %v66 = vld [vmem:[%s1 + $0x1b8] sm:$0xff]
  %v67 = vld [vmem:[%s1 + $0x1c0] sm:$0xff]
  %v68 = vld [vmem:[%s1 + $0x1c8] sm:$0xff]
  %v69 = vld [vmem:[%s1 + $0x1d0] sm:$0xff]
  %v70 = vld [vmem:[%s1 + $0x1d8] sm:$0xff]
  %v71 = vld [vmem:[%s1 + $0x1e0] sm:$0xff]
  %v72 = vld [vmem:[%s1 + $0x1e8] sm:$0xff]
  %v73 = vld [vmem:[%s1 + $0x1f0] sm:$0xff]
  %v74 = vld [vmem:[%s1 + $0x1f8] sm:$0xff]
  %v75 = vld [vmem:[%s1 + $0x200] sm:$0xff]
  %v76 = vld [vmem:[%s1 + $0x208] sm:$0xff]
  %v77 = vld [vmem:[%s1 + $0x210] sm:$0xff]
  %v78 = vld [vmem:[%s1 + $0x218] sm:$0xff]
  %v79 = vld [vmem:[%s1 + $0x220] sm:$0xff]
  %v80 = vld [vmem:[%s1 + $0x228] sm:$0xff]
  %v81 = vld [vmem:[%s1 + $0x230] sm:$0xff]
  %v82 = vld [vmem:[%s1 + $0x238] sm:$0xff]
  %s83 = scalar_lea.vmem %s1, 576
  %v84 = vld [vmem:[%s83] ss:$8 sm:$0x7]
  %s85 = scalar_lea.vmem %s1, 577
  %v86 = vld [vmem:[%s85] ss:$8 sm:$0x7]
  %v87 = vld [vmem:[%s0] sm:$0xff]
  %v89 = vperm.slane %v84, 0
  %v90 = vperm.slane %v84, 1
  %v91 = vperm.slane %v84, 2
  %vm95 = vcmask 523264
  %v97 = vsel %vm95, %v87, 0
  %99 = vmatpush.msra.mxu0 0.0
  %100 = vmatpush.msra.mxu0 0.0
  %101 = vmatpush.msra.mxu0 0.0
  %102 = vmatpush.msra.mxu0 0.0
  %103 = vmatpush.msra.mxu0 0.0
  %104 = vmatpush.msra.mxu0 0.0
  %105 = vmatpush.msra.mxu0 0.0
  %106 = vmatpush.msra.mxu0 0.0
  %107 = vmatpush.msra.mxu0 %v32
  %108 = vmatpush.msra.mxu0 %v29
  %109 = vmatpush.msra.mxu0 %v26
  %110 = vmatpush.msra.mxu0 %v23
  %111 = vmatpush.msra.mxu0 %v20
  %112 = vmatpush.msra.mxu0 %v17
  %113 = vmatpush.msra.mxu0 %v14
  %114 = vmatpush.msra.mxu0 %v11
  %115 = vmatmul.f32.gmra.mxu0 %v97
  %v116 = vpop.f32.mrf.mxu0
  %v117 = vadd.f32 %v89, %v116
  %118 = vdwg.mxu0
  %119 = vmatpush.msra.mxu0 0.0
  %120 = vmatpush.msra.mxu0 0.0
  %121 = vmatpush.msra.mxu0 0.0
  %122 = vmatpush.msra.mxu0 0.0
  %123 = vmatpush.msra.mxu0 0.0
  %124 = vmatpush.msra.mxu0 0.0
  %125 = vmatpush.msra.mxu0 0.0
  %126 = vmatpush.msra.mxu0 0.0
  %127 = vmatpush.msra.mxu0 %v33
  %128 = vmatpush.msra.mxu0 %v30
  %129 = vmatpush.msra.mxu0 %v27
  %130 = vmatpush.msra.mxu0 %v24
  %131 = vmatpush.msra.mxu0 %v21
  %132 = vmatpush.msra.mxu0 %v18
  %133 = vmatpush.msra.mxu0 %v15
  %134 = vmatpush.msra.mxu0 %v12
  %135 = vmatmul.f32.gmra.mxu0 %v97
  %v136 = vpop.f32.mrf.mxu0
  %v137 = vadd.f32 %v90, %v136
  %138 = vdwg.mxu0
  %139 = vmatpush.msra.mxu0 0.0
  %140 = vmatpush.msra.mxu0 0.0
  %141 = vmatpush.msra.mxu0 0.0
  %142 = vmatpush.msra.mxu0 0.0
  %143 = vmatpush.msra.mxu0 0.0
  %144 = vmatpush.msra.mxu0 0.0
  %145 = vmatpush.msra.mxu0 0.0
  %146 = vmatpush.msra.mxu0 0.0
  %147 = vmatpush.msra.mxu0 %v34
  %148 = vmatpush.msra.mxu0 %v31
  %149 = vmatpush.msra.mxu0 %v28
  %150 = vmatpush.msra.mxu0 %v25
  %151 = vmatpush.msra.mxu0 %v22
  %152 = vmatpush.msra.mxu0 %v19
  %153 = vmatpush.msra.mxu0 %v16
  %154 = vmatpush.msra.mxu0 %v13
  %155 = vmatmul.f32.gmra.mxu0 %v97
  %v156 = vpop.f32.mrf.mxu0
  %v157 = vadd.f32 %v91, %v156
  %158 = vdwg.mxu0
  %v160 = vperm.slane %v86, 0
  %v161 = vperm.slane %v86, 1
  %v162 = vperm.slane %v86, 2
  %166 = vmatpush.msra.mxu0 %v80
  %167 = vmatpush.msra.mxu0 %v77
  %168 = vmatpush.msra.mxu0 %v74
  %169 = vmatpush.msra.mxu0 %v71
  %170 = vmatpush.msra.mxu0 %v68
  %171 = vmatpush.msra.mxu0 %v65
  %172 = vmatpush.msra.mxu0 %v62
  %173 = vmatpush.msra.mxu0 %v59
  %174 = vmatpush.msra.mxu0 %v56
  %175 = vmatpush.msra.mxu0 %v53
  %176 = vmatpush.msra.mxu0 %v50
  %177 = vmatpush.msra.mxu0 %v47
  %178 = vmatpush.msra.mxu0 %v44
  %179 = vmatpush.msra.mxu0 %v41
  %180 = vmatpush.msra.mxu0 %v38
  %181 = vmatpush.msra.mxu0 %v35
  %182 = vmatmul.f32.gmra.mxu0 0.0
  %v183 = vpop.f32.mrf.mxu0
  %v184 = vadd.f32 %v160, %v183
  %185 = vdwg.mxu0
  %186 = vmatpush.msra.mxu0 %v81
  %187 = vmatpush.msra.mxu0 %v78
  %188 = vmatpush.msra.mxu0 %v75
  %189 = vmatpush.msra.mxu0 %v72
  %190 = vmatpush.msra.mxu0 %v69
  %191 = vmatpush.msra.mxu0 %v66
  %192 = vmatpush.msra.mxu0 %v63
  %193 = vmatpush.msra.mxu0 %v60
  %194 = vmatpush.msra.mxu0 %v57
  %195 = vmatpush.msra.mxu0 %v54
  %196 = vmatpush.msra.mxu0 %v51
  %197 = vmatpush.msra.mxu0 %v48
  %198 = vmatpush.msra.mxu0 %v45
  %199 = vmatpush.msra.mxu0 %v42
  %200 = vmatpush.msra.mxu0 %v39
  %201 = vmatpush.msra.mxu0 %v36
  %202 = vmatmul.f32.gmra.mxu0 0.0
  %v203 = vpop.f32.mrf.mxu0
  %v204 = vadd.f32 %v161, %v203
  %205 = vdwg.mxu0
  %206 = vmatpush.msra.mxu0 %v82
  %207 = vmatpush.msra.mxu0 %v79
  %208 = vmatpush.msra.mxu0 %v76
  %209 = vmatpush.msra.mxu0 %v73
  %210 = vmatpush.msra.mxu0 %v70
  %211 = vmatpush.msra.mxu0 %v67
  %212 = vmatpush.msra.mxu0 %v64
  %213 = vmatpush.msra.mxu0 %v61
  %214 = vmatpush.msra.mxu0 %v58
  %215 = vmatpush.msra.mxu0 %v55
  %216 = vmatpush.msra.mxu0 %v52
  %217 = vmatpush.msra.mxu0 %v49
  %218 = vmatpush.msra.mxu0 %v46
  %219 = vmatpush.msra.mxu0 %v43
  %220 = vmatpush.msra.mxu0 %v40
  %221 = vmatpush.msra.mxu0 %v37
  %222 = vmatmul.f32.gmra.mxu0 0.0
  %v223 = vpop.f32.mrf.mxu0
  %v224 = vadd.f32 %v162, %v223
  %225 = vdwg.mxu0
  %v226 = vadd.f32 %v117, %v184
  %v227 = vxor.u32 %v226, 2147483648
  %v228 = vmul.f32 %v227, 1.442695
  %v229 = vpow.pop %v228
  %v230 = vadd.f32 %v229, 1.0
  %v231 = vrcp.pop %v230
  %v232 = vmul.f32 %v230, %v231
  %v233 = vsub.f32 1.0, %v232
  %v234 = vmul.f32 %v231, %v233
  %v235 = vadd.f32 %v231, %v234
  %vm236 = vweird.f32 %v230
  %vm237 = vweird.f32 %v231
  %vm238 = vmor %vm236, %vm237
  %v239 = vsel %vm238, %v231, %v235
  %v240 = vand.u32 2147483647, %v230
  %vm241 = vcmp.eq.f32.partialorder %v240, 8.507059e+37
  %v242 = vand.u32 %v230, 2147483648
  %v243 = vor.u32 1.1754944e-38, %v242
  %v244 = vsel %vm241, %v243, %v239
  %v245 = vmul.f32 1.0, %v244
  %v246 = vadd.f32 %v137, %v204
  %v247 = vxor.u32 %v246, 2147483648
  %v248 = vmul.f32 %v247, 1.442695
  %v249 = vpow.pop %v248
  %v250 = vadd.f32 %v249, 1.0
  %v251 = vrcp.pop %v250
  %v252 = vmul.f32 %v250, %v251
  %v253 = vsub.f32 1.0, %v252
  %v254 = vmul.f32 %v251, %v253
  %v255 = vadd.f32 %v251, %v254
  %vm256 = vweird.f32 %v250
  %vm257 = vweird.f32 %v251
  %vm258 = vmor %vm256, %vm257
  %v259 = vsel %vm258, %v251, %v255
  %v260 = vand.u32 2147483647, %v250
  %vm261 = vcmp.eq.f32.partialorder %v260, 8.507059e+37
  %v262 = vand.u32 %v250, 2147483648
  %v263 = vor.u32 1.1754944e-38, %v262
  %v264 = vsel %vm261, %v263, %v259
  %v265 = vmul.f32 1.0, %v264
  %v266 = vmul.f32 %v245, %v224
  %v267 = vadd.f32 %v157, %v266
  %v268 = vtanh.pop %v267
  %v269 = vsub.f32 1.0, %v265
  %v270 = vmul.f32 %v269, %v268
  %v271 = vmul.f32 %v265, 0.0
  %v272 = vadd.f32 %v270, %v271
  %273 = vmatpush.msra.mxu0 %v80
  %274 = vmatpush.msra.mxu0 %v77
  %275 = vmatpush.msra.mxu0 %v74
  %276 = vmatpush.msra.mxu0 %v71
  %277 = vmatpush.msra.mxu0 %v68
  %278 = vmatpush.msra.mxu0 %v65
  %279 = vmatpush.msra.mxu0 %v62
  %280 = vmatpush.msra.mxu0 %v59
  %281 = vmatpush.msra.mxu0 %v56
  %282 = vmatpush.msra.mxu0 %v53
  %283 = vmatpush.msra.mxu0 %v50
  %284 = vmatpush.msra.mxu0 %v47
  %285 = vmatpush.msra.mxu0 %v44
  %286 = vmatpush.msra.mxu0 %v41
  %287 = vmatpush.msra.mxu0 %v38
  %288 = vmatpush.msra.mxu0 %v35
  %289 = vmatmul.f32.gmra.mxu0 %v272
  %v290 = vpop.f32.mrf.mxu0
  %v291 = vadd.f32 %v160, %v290
  %292 = vdwg.mxu0
  %293 = vmatpush.msra.mxu0 %v81
  %294 = vmatpush.msra.mxu0 %v78
  %295 = vmatpush.msra.mxu0 %v75
  %296 = vmatpush.msra.mxu0 %v72
  %297 = vmatpush.msra.mxu0 %v69
  %298 = vmatpush.msra.mxu0 %v66
  %299 = vmatpush.msra.mxu0 %v63
  %300 = vmatpush.msra.mxu0 %v60
  %301 = vmatpush.msra.mxu0 %v57
  %302 = vmatpush.msra.mxu0 %v54
  %303 = vmatpush.msra.mxu0 %v51
  %304 = vmatpush.msra.mxu0 %v48
  %305 = vmatpush.msra.mxu0 %v45
  %306 = vmatpush.msra.mxu0 %v42
  %307 = vmatpush.msra.mxu0 %v39
  %308 = vmatpush.msra.mxu0 %v36
  %309 = vmatmul.f32.gmra.mxu0 %v272
  %v310 = vpop.f32.mrf.mxu0
  %v311 = vadd.f32 %v161, %v310
  %312 = vdwg.mxu0
  %313 = vmatpush.msra.mxu0 %v82
  %314 = vmatpush.msra.mxu0 %v79
  %315 = vmatpush.msra.mxu0 %v76
  %316 = vmatpush.msra.mxu0 %v73
  %317 = vmatpush.msra.mxu0 %v70
  %318 = vmatpush.msra.mxu0 %v67
  %319 = vmatpush.msra.mxu0 %v64
  %320 = vmatpush.msra.mxu0 %v61
  %321 = vmatpush.msra.mxu0 %v58
  %322 = vmatpush.msra.mxu0 %v55
  %323 = vmatpush.msra.mxu0 %v52
  %324 = vmatpush.msra.mxu0 %v49
  %325 = vmatpush.msra.mxu0 %v46
  %326 = vmatpush.msra.mxu0 %v43
  %327 = vmatpush.msra.mxu0 %v40
  %328 = vmatpush.msra.mxu0 %v37
  %329 = vmatmul.f32.gmra.mxu0 %v272
  %v330 = vpop.f32.mrf.mxu0
  %v331 = vadd.f32 %v162, %v330
  %332 = vdwg.mxu0
  %v334 = vrot.slane %v291, 7
  %v336 = vadd.f32 %v117, %v334
  %v337 = vxor.u32 %v336, 2147483648
  %v338 = vmul.f32 %v337, 1.442695
  %v339 = vpow.pop %v338
  %v340 = vadd.f32 %v339, 1.0
  %v341 = vrcp.pop %v340
  %v342 = vmul.f32 %v340, %v341
  %v343 = vsub.f32 1.0, %v342
  %v344 = vmul.f32 %v341, %v343
  %v345 = vadd.f32 %v341, %v344
  %vm346 = vweird.f32 %v340
  %vm347 = vweird.f32 %v341
  %vm348 = vmor %vm346, %vm347
  %v349 = vsel %vm348, %v341, %v345
  %v350 = vand.u32 2147483647, %v340
  %vm351 = vcmp.eq.f32.partialorder %v350, 8.507059e+37
  %v352 = vand.u32 %v340, 2147483648
  %v353 = vor.u32 1.1754944e-38, %v352
  %v354 = vsel %vm351, %v353, %v349
  %v355 = vmul.f32 1.0, %v354
  %v357 = vrot.slane %v311, 7
  %v359 = vadd.f32 %v137, %v357
  %v360 = vxor.u32 %v359, 2147483648
  %v361 = vmul.f32 %v360, 1.442695
  %v362 = vpow.pop %v361
  %v363 = vadd.f32 %v362, 1.0
  %v364 = vrcp.pop %v363
  %v365 = vmul.f32 %v363, %v364
  %v366 = vsub.f32 1.0, %v365
  %v367 = vmul.f32 %v364, %v366
  %v368 = vadd.f32 %v364, %v367
  %vm369 = vweird.f32 %v363
  %vm370 = vweird.f32 %v364
  %vm371 = vmor %vm369, %vm370
  %v372 = vsel %vm371, %v364, %v368
  %v373 = vand.u32 2147483647, %v363
  %vm374 = vcmp.eq.f32.partialorder %v373, 8.507059e+37
  %v375 = vand.u32 %v363, 2147483648
  %v376 = vor.u32 1.1754944e-38, %v375
  %v377 = vsel %vm374, %v376, %v372
  %v378 = vmul.f32 1.0, %v377
  %v380 = vrot.slane %v331, 7
  %v382 = vmul.f32 %v355, %v380
  %v383 = vadd.f32 %v157, %v382
  %v384 = vtanh.pop %v383
  %v385 = vsub.f32 1.0, %v378
  %v386 = vmul.f32 %v385, %v384
  %v388 = vrot.slane %v272, 7
  %v390 = vmul.f32 %v378, %v388
  %v391 = vadd.f32 %v386, %v390
  %v393 = vrot.slane %v391, 1
  %395 = vmatpush.msra.mxu0 %v80
  %396 = vmatpush.msra.mxu0 %v77
  %397 = vmatpush.msra.mxu0 %v74
  %398 = vmatpush.msra.mxu0 %v71
  %399 = vmatpush.msra.mxu0 %v68
  %400 = vmatpush.msra.mxu0 %v65
  %401 = vmatpush.msra.mxu0 %v62
  %402 = vmatpush.msra.mxu0 %v59
  %403 = vmatpush.msra.mxu0 %v56
  %404 = vmatpush.msra.mxu0 %v53
  %405 = vmatpush.msra.mxu0 %v50
  %406 = vmatpush.msra.mxu0 %v47
  %407 = vmatpush.msra.mxu0 %v44
  %408 = vmatpush.msra.mxu0 %v41
  %409 = vmatpush.msra.mxu0 %v38
  %410 = vmatpush.msra.mxu0 %v35
  %411 = vmatmul.f32.gmra.mxu0 %v393
  %v412 = vpop.f32.mrf.mxu0
  %v413 = vadd.f32 %v160, %v412
  %414 = vdwg.mxu0
  %415 = vmatpush.msra.mxu0 %v81
  %416 = vmatpush.msra.mxu0 %v78
  %417 = vmatpush.msra.mxu0 %v75
  %418 = vmatpush.msra.mxu0 %v72
  %419 = vmatpush.msra.mxu0 %v69
  %420 = vmatpush.msra.mxu0 %v66
  %421 = vmatpush.msra.mxu0 %v63
  %422 = vmatpush.msra.mxu0 %v60
  %423 = vmatpush.msra.mxu0 %v57
  %424 = vmatpush.msra.mxu0 %v54
  %425 = vmatpush.msra.mxu0 %v51
  %426 = vmatpush.msra.mxu0 %v48
  %427 = vmatpush.msra.mxu0 %v45
  %428 = vmatpush.msra.mxu0 %v42
  %429 = vmatpush.msra.mxu0 %v39
  %430 = vmatpush.msra.mxu0 %v36
  %431 = vmatmul.f32.gmra.mxu0 %v393
  %v432 = vpop.f32.mrf.mxu0
  %v433 = vadd.f32 %v161, %v432
  %434 = vdwg.mxu0
  %435 = vmatpush.msra.mxu0 %v82
  %436 = vmatpush.msra.mxu0 %v79
  %437 = vmatpush.msra.mxu0 %v76
  %438 = vmatpush.msra.mxu0 %v73
  %439 = vmatpush.msra.mxu0 %v70
  %440 = vmatpush.msra.mxu0 %v67
  %441 = vmatpush.msra.mxu0 %v64
  %442 = vmatpush.msra.mxu0 %v61
  %443 = vmatpush.msra.mxu0 %v58
  %444 = vmatpush.msra.mxu0 %v55
  %445 = vmatpush.msra.mxu0 %v52
  %446 = vmatpush.msra.mxu0 %v49
  %447 = vmatpush.msra.mxu0 %v46
  %448 = vmatpush.msra.mxu0 %v43
  %449 = vmatpush.msra.mxu0 %v40
  %450 = vmatpush.msra.mxu0 %v37
  %451 = vmatmul.f32.gmra.mxu0 %v393
  %v452 = vpop.f32.mrf.mxu0
  %v453 = vadd.f32 %v162, %v452
  %454 = vdwg.mxu0
  %v456 = vrot.slane %v413, 6
  %v458 = vadd.f32 %v117, %v456
  %v459 = vxor.u32 %v458, 2147483648
  %v460 = vmul.f32 %v459, 1.442695
  %v461 = vpow.pop %v460
  %v462 = vadd.f32 %v461, 1.0
  %v463 = vrcp.pop %v462
  %v464 = vmul.f32 %v462, %v463
  %v465 = vsub.f32 1.0, %v464
  %v466 = vmul.f32 %v463, %v465
  %v467 = vadd.f32 %v463, %v466
  %vm468 = vweird.f32 %v462
  %vm469 = vweird.f32 %v463
  %vm470 = vmor %vm468, %vm469
  %v471 = vsel %vm470, %v463, %v467
  %v472 = vand.u32 2147483647, %v462
  %vm473 = vcmp.eq.f32.partialorder %v472, 8.507059e+37
  %v474 = vand.u32 %v462, 2147483648
  %v475 = vor.u32 1.1754944e-38, %v474
  %v476 = vsel %vm473, %v475, %v471
  %v477 = vmul.f32 1.0, %v476
  %v479 = vrot.slane %v433, 6
  %v481 = vadd.f32 %v137, %v479
  %v482 = vxor.u32 %v481, 2147483648
  %v483 = vmul.f32 %v482, 1.442695
  %v484 = vpow.pop %v483
  %v485 = vadd.f32 %v484, 1.0
  %v486 = vrcp.pop %v485
  %v487 = vmul.f32 %v485, %v486
  %v488 = vsub.f32 1.0, %v487
  %v489 = vmul.f32 %v486, %v488
  %v490 = vadd.f32 %v486, %v489
  %vm491 = vweird.f32 %v485
  %vm492 = vweird.f32 %v486
  %vm493 = vmor %vm491, %vm492
  %v494 = vsel %vm493, %v486, %v490
  %v495 = vand.u32 2147483647, %v485
  %vm496 = vcmp.eq.f32.partialorder %v495, 8.507059e+37
  %v497 = vand.u32 %v485, 2147483648
  %v498 = vor.u32 1.1754944e-38, %v497
  %v499 = vsel %vm496, %v498, %v494
  %v500 = vmul.f32 1.0, %v499
  %v502 = vrot.slane %v453, 6
  %v504 = vmul.f32 %v477, %v502
  %v505 = vadd.f32 %v157, %v504
  %v506 = vtanh.pop %v505
  %v507 = vsub.f32 1.0, %v500
  %v508 = vmul.f32 %v507, %v506
  %v509 = vrot.slane %v391, 7
  %v511 = vmul.f32 %v500, %v509
  %v512 = vadd.f32 %v508, %v511
  %v514 = vrot.slane %v512, 2
  %516 = vmatpush.msra.mxu0 %v80
  %517 = vmatpush.msra.mxu0 %v77
  %518 = vmatpush.msra.mxu0 %v74
  %519 = vmatpush.msra.mxu0 %v71
  %520 = vmatpush.msra.mxu0 %v68
  %521 = vmatpush.msra.mxu0 %v65
  %522 = vmatpush.msra.mxu0 %v62
  %523 = vmatpush.msra.mxu0 %v59
  %524 = vmatpush.msra.mxu0 %v56
  %525 = vmatpush.msra.mxu0 %v53
  %526 = vmatpush.msra.mxu0 %v50
  %527 = vmatpush.msra.mxu0 %v47
  %528 = vmatpush.msra.mxu0 %v44
  %529 = vmatpush.msra.mxu0 %v41
  %530 = vmatpush.msra.mxu0 %v38
  %531 = vmatpush.msra.mxu0 %v35
  %532 = vmatmul.f32.gmra.mxu0 %v514
  %v533 = vpop.f32.mrf.mxu0
  %v534 = vadd.f32 %v160, %v533
  %535 = vdwg.mxu0
  %536 = vmatpush.msra.mxu0 %v81
  %537 = vmatpush.msra.mxu0 %v78
  %538 = vmatpush.msra.mxu0 %v75
  %539 = vmatpush.msra.mxu0 %v72
  %540 = vmatpush.msra.mxu0 %v69
  %541 = vmatpush.msra.mxu0 %v66
  %542 = vmatpush.msra.mxu0 %v63
  %543 = vmatpush.msra.mxu0 %v60
  %544 = vmatpush.msra.mxu0 %v57
  %545 = vmatpush.msra.mxu0 %v54
  %546 = vmatpush.msra.mxu0 %v51
  %547 = vmatpush.msra.mxu0 %v48
  %548 = vmatpush.msra.mxu0 %v45
  %549 = vmatpush.msra.mxu0 %v42
  %550 = vmatpush.msra.mxu0 %v39
  %551 = vmatpush.msra.mxu0 %v36
  %552 = vmatmul.f32.gmra.mxu0 %v514
  %v553 = vpop.f32.mrf.mxu0
  %v554 = vadd.f32 %v161, %v553
  %555 = vdwg.mxu0
  %556 = vmatpush.msra.mxu0 %v82
  %557 = vmatpush.msra.mxu0 %v79
  %558 = vmatpush.msra.mxu0 %v76
  %559 = vmatpush.msra.mxu0 %v73
  %560 = vmatpush.msra.mxu0 %v70
  %561 = vmatpush.msra.mxu0 %v67
  %562 = vmatpush.msra.mxu0 %v64
  %563 = vmatpush.msra.mxu0 %v61
  %564 = vmatpush.msra.mxu0 %v58
  %565 = vmatpush.msra.mxu0 %v55
  %566 = vmatpush.msra.mxu0 %v52
  %567 = vmatpush.msra.mxu0 %v49
  %568 = vmatpush.msra.mxu0 %v46
  %569 = vmatpush.msra.mxu0 %v43
  %570 = vmatpush.msra.mxu0 %v40
  %571 = vmatpush.msra.mxu0 %v37
  %572 = vmatmul.f32.gmra.mxu0 %v514
  %v573 = vpop.f32.mrf.mxu0
  %v574 = vadd.f32 %v162, %v573
  %575 = vdwg.mxu0
  %v577 = vrot.slane %v534, 5
  %v579 = vadd.f32 %v117, %v577
  %v580 = vxor.u32 %v579, 2147483648
  %v581 = vmul.f32 %v580, 1.442695
  %v582 = vpow.pop %v581
  %v583 = vadd.f32 %v582, 1.0
  %v584 = vrcp.pop %v583
  %v585 = vmul.f32 %v583, %v584
  %v586 = vsub.f32 1.0, %v585
  %v587 = vmul.f32 %v584, %v586
  %v588 = vadd.f32 %v584, %v587
  %vm589 = vweird.f32 %v583
  %vm590 = vweird.f32 %v584
  %vm591 = vmor %vm589, %vm590
  %v592 = vsel %vm591, %v584, %v588
  %v593 = vand.u32 2147483647, %v583
  %vm594 = vcmp.eq.f32.partialorder %v593, 8.507059e+37
  %v595 = vand.u32 %v583, 2147483648
  %v596 = vor.u32 1.1754944e-38, %v595
  %v597 = vsel %vm594, %v596, %v592
  %v598 = vmul.f32 1.0, %v597
  %v600 = vrot.slane %v554, 5
  %v602 = vadd.f32 %v137, %v600
  %v603 = vxor.u32 %v602, 2147483648
  %v604 = vmul.f32 %v603, 1.442695
  %v605 = vpow.pop %v604
  %v606 = vadd.f32 %v605, 1.0
  %v607 = vrcp.pop %v606
  %v608 = vmul.f32 %v606, %v607
  %v609 = vsub.f32 1.0, %v608
  %v610 = vmul.f32 %v607, %v609
  %v611 = vadd.f32 %v607, %v610
  %vm612 = vweird.f32 %v606
  %vm613 = vweird.f32 %v607
  %vm614 = vmor %vm612, %vm613
  %v615 = vsel %vm614, %v607, %v611
  %v616 = vand.u32 2147483647, %v606
  %vm617 = vcmp.eq.f32.partialorder %v616, 8.507059e+37
  %v618 = vand.u32 %v606, 2147483648
  %v619 = vor.u32 1.1754944e-38, %v618
  %v620 = vsel %vm617, %v619, %v615
  %v621 = vmul.f32 1.0, %v620
  %v623 = vrot.slane %v574, 5
  %v625 = vmul.f32 %v598, %v623
  %v626 = vadd.f32 %v157, %v625
  %v627 = vtanh.pop %v626
  %v628 = vsub.f32 1.0, %v621
  %v629 = vmul.f32 %v628, %v627
  %v630 = vrot.slane %v512, 7
  %v632 = vmul.f32 %v621, %v630
  %v633 = vadd.f32 %v629, %v632
  %v635 = vrot.slane %v633, 3
  %637 = vmatpush.msra.mxu0 %v80
  %638 = vmatpush.msra.mxu0 %v77
  %639 = vmatpush.msra.mxu0 %v74
  %640 = vmatpush.msra.mxu0 %v71
  %641 = vmatpush.msra.mxu0 %v68
  %642 = vmatpush.msra.mxu0 %v65
  %643 = vmatpush.msra.mxu0 %v62
  %644 = vmatpush.msra.mxu0 %v59
  %645 = vmatpush.msra.mxu0 %v56
  %646 = vmatpush.msra.mxu0 %v53
  %647 = vmatpush.msra.mxu0 %v50
  %648 = vmatpush.msra.mxu0 %v47
  %649 = vmatpush.msra.mxu0 %v44
  %650 = vmatpush.msra.mxu0 %v41
  %651 = vmatpush.msra.mxu0 %v38
  %652 = vmatpush.msra.mxu0 %v35
  %653 = vmatmul.f32.gmra.mxu0 %v635
  %v654 = vpop.f32.mrf.mxu0
  %v655 = vadd.f32 %v160, %v654
  %656 = vdwg.mxu0
  %657 = vmatpush.msra.mxu0 %v81
  %658 = vmatpush.msra.mxu0 %v78
  %659 = vmatpush.msra.mxu0 %v75
  %660 = vmatpush.msra.mxu0 %v72
  %661 = vmatpush.msra.mxu0 %v69
  %662 = vmatpush.msra.mxu0 %v66
  %663 = vmatpush.msra.mxu0 %v63
  %664 = vmatpush.msra.mxu0 %v60
  %665 = vmatpush.msra.mxu0 %v57
  %666 = vmatpush.msra.mxu0 %v54
  %667 = vmatpush.msra.mxu0 %v51
  %668 = vmatpush.msra.mxu0 %v48
  %669 = vmatpush.msra.mxu0 %v45
  %670 = vmatpush.msra.mxu0 %v42
  %671 = vmatpush.msra.mxu0 %v39
  %672 = vmatpush.msra.mxu0 %v36
  %673 = vmatmul.f32.gmra.mxu0 %v635
  %v674 = vpop.f32.mrf.mxu0
  %v675 = vadd.f32 %v161, %v674
  %676 = vdwg.mxu0
  %677 = vmatpush.msra.mxu0 %v82
  %678 = vmatpush.msra.mxu0 %v79
  %679 = vmatpush.msra.mxu0 %v76
  %680 = vmatpush.msra.mxu0 %v73
  %681 = vmatpush.msra.mxu0 %v70
  %682 = vmatpush.msra.mxu0 %v67
  %683 = vmatpush.msra.mxu0 %v64
  %684 = vmatpush.msra.mxu0 %v61
  %685 = vmatpush.msra.mxu0 %v58
  %686 = vmatpush.msra.mxu0 %v55
  %687 = vmatpush.msra.mxu0 %v52
  %688 = vmatpush.msra.mxu0 %v49
  %689 = vmatpush.msra.mxu0 %v46
  %690 = vmatpush.msra.mxu0 %v43
  %691 = vmatpush.msra.mxu0 %v40
  %692 = vmatpush.msra.mxu0 %v37
  %693 = vmatmul.f32.gmra.mxu0 %v635
  %v694 = vpop.f32.mrf.mxu0
  %v695 = vadd.f32 %v162, %v694
  %696 = vdwg.mxu0
  %v698 = vrot.slane %v655, 4
  %v700 = vadd.f32 %v117, %v698
  %v701 = vxor.u32 %v700, 2147483648
  %v702 = vmul.f32 %v701, 1.442695
  %v703 = vpow.pop %v702
  %v704 = vadd.f32 %v703, 1.0
  %v705 = vrcp.pop %v704
  %v706 = vmul.f32 %v704, %v705
  %v707 = vsub.f32 1.0, %v706
  %v708 = vmul.f32 %v705, %v707
  %v709 = vadd.f32 %v705, %v708
  %vm710 = vweird.f32 %v704
  %vm711 = vweird.f32 %v705
  %vm712 = vmor %vm710, %vm711
  %v713 = vsel %vm712, %v705, %v709
  %v714 = vand.u32 2147483647, %v704
  %vm715 = vcmp.eq.f32.partialorder %v714, 8.507059e+37
  %v716 = vand.u32 %v704, 2147483648
  %v717 = vor.u32 1.1754944e-38, %v716
  %v718 = vsel %vm715, %v717, %v713
  %v719 = vmul.f32 1.0, %v718
  %v721 = vrot.slane %v675, 4
  %v723 = vadd.f32 %v137, %v721
  %v724 = vxor.u32 %v723, 2147483648
  %v725 = vmul.f32 %v724, 1.442695
  %v726 = vpow.pop %v725
  %v727 = vadd.f32 %v726, 1.0
  %v728 = vrcp.pop %v727
  %v729 = vmul.f32 %v727, %v728
  %v730 = vsub.f32 1.0, %v729
  %v731 = vmul.f32 %v728, %v730
  %v732 = vadd.f32 %v728, %v731
  %vm733 = vweird.f32 %v727
  %vm734 = vweird.f32 %v728
  %vm735 = vmor %vm733, %vm734
  %v736 = vsel %vm735, %v728, %v732
  %v737 = vand.u32 2147483647, %v727
  %vm738 = vcmp.eq.f32.partialorder %v737, 8.507059e+37
  %v739 = vand.u32 %v727, 2147483648
  %v740 = vor.u32 1.1754944e-38, %v739
  %v741 = vsel %vm738, %v740, %v736
  %v742 = vmul.f32 1.0, %v741
  %v744 = vrot.slane %v695, 4
  %v746 = vmul.f32 %v719, %v744
  %v747 = vadd.f32 %v157, %v746
  %v748 = vtanh.pop %v747
  %v749 = vsub.f32 1.0, %v742
  %v750 = vmul.f32 %v749, %v748
  %v751 = vrot.slane %v633, 7
  %v753 = vmul.f32 %v742, %v751
  %v754 = vadd.f32 %v750, %v753
  %v756 = vrot.slane %v754, 4
  %758 = vmatpush.msra.mxu0 %v80
  %759 = vmatpush.msra.mxu0 %v77
  %760 = vmatpush.msra.mxu0 %v74
  %761 = vmatpush.msra.mxu0 %v71
  %762 = vmatpush.msra.mxu0 %v68
  %763 = vmatpush.msra.mxu0 %v65
  %764 = vmatpush.msra.mxu0 %v62
  %765 = vmatpush.msra.mxu0 %v59
  %766 = vmatpush.msra.mxu0 %v56
  %767 = vmatpush.msra.mxu0 %v53
  %768 = vmatpush.msra.mxu0 %v50
  %769 = vmatpush.msra.mxu0 %v47
  %770 = vmatpush.msra.mxu0 %v44
  %771 = vmatpush.msra.mxu0 %v41
  %772 = vmatpush.msra.mxu0 %v38
  %773 = vmatpush.msra.mxu0 %v35
  %774 = vmatmul.f32.gmra.mxu0 %v756
  %v775 = vpop.f32.mrf.mxu0
  %v776 = vadd.f32 %v160, %v775
  %777 = vdwg.mxu0
  %778 = vmatpush.msra.mxu0 %v81
  %779 = vmatpush.msra.mxu0 %v78
  %780 = vmatpush.msra.mxu0 %v75
  %781 = vmatpush.msra.mxu0 %v72
  %782 = vmatpush.msra.mxu0 %v69
  %783 = vmatpush.msra.mxu0 %v66
  %784 = vmatpush.msra.mxu0 %v63
  %785 = vmatpush.msra.mxu0 %v60
  %786 = vmatpush.msra.mxu0 %v57
  %787 = vmatpush.msra.mxu0 %v54
  %788 = vmatpush.msra.mxu0 %v51
  %789 = vmatpush.msra.mxu0 %v48
  %790 = vmatpush.msra.mxu0 %v45
  %791 = vmatpush.msra.mxu0 %v42
  %792 = vmatpush.msra.mxu0 %v39
  %793 = vmatpush.msra.mxu0 %v36
  %794 = vmatmul.f32.gmra.mxu0 %v756
  %v795 = vpop.f32.mrf.mxu0
  %v796 = vadd.f32 %v161, %v795
  %797 = vdwg.mxu0
  %798 = vmatpush.msra.mxu0 %v82
  %799 = vmatpush.msra.mxu0 %v79
  %800 = vmatpush.msra.mxu0 %v76
  %801 = vmatpush.msra.mxu0 %v73
  %802 = vmatpush.msra.mxu0 %v70
  %803 = vmatpush.msra.mxu0 %v67
  %804 = vmatpush.msra.mxu0 %v64
  %805 = vmatpush.msra.mxu0 %v61
  %806 = vmatpush.msra.mxu0 %v58
  %807 = vmatpush.msra.mxu0 %v55
  %808 = vmatpush.msra.mxu0 %v52
  %809 = vmatpush.msra.mxu0 %v49
  %810 = vmatpush.msra.mxu0 %v46
  %811 = vmatpush.msra.mxu0 %v43
  %812 = vmatpush.msra.mxu0 %v40
  %813 = vmatpush.msra.mxu0 %v37
  %814 = vmatmul.f32.gmra.mxu0 %v756
  %v815 = vpop.f32.mrf.mxu0
  %v816 = vadd.f32 %v162, %v815
  %817 = vdwg.mxu0
  %v819 = vrot.slane %v776, 3
  %v821 = vadd.f32 %v117, %v819
  %v822 = vxor.u32 %v821, 2147483648
  %v823 = vmul.f32 %v822, 1.442695
  %v824 = vpow.pop %v823
  %v825 = vadd.f32 %v824, 1.0
  %v826 = vrcp.pop %v825
  %v827 = vmul.f32 %v825, %v826
  %v828 = vsub.f32 1.0, %v827
  %v829 = vmul.f32 %v826, %v828
  %v830 = vadd.f32 %v826, %v829
  %vm831 = vweird.f32 %v825
  %vm832 = vweird.f32 %v826
  %vm833 = vmor %vm831, %vm832
  %v834 = vsel %vm833, %v826, %v830
  %v835 = vand.u32 2147483647, %v825
  %vm836 = vcmp.eq.f32.partialorder %v835, 8.507059e+37
  %v837 = vand.u32 %v825, 2147483648
  %v838 = vor.u32 1.1754944e-38, %v837
  %v839 = vsel %vm836, %v838, %v834
  %v840 = vmul.f32 1.0, %v839
  %v842 = vrot.slane %v796, 3
  %v844 = vadd.f32 %v137, %v842
  %v845 = vxor.u32 %v844, 2147483648
  %v846 = vmul.f32 %v845, 1.442695
  %v847 = vpow.pop %v846
  %v848 = vadd.f32 %v847, 1.0
  %v849 = vrcp.pop %v848
  %v850 = vmul.f32 %v848, %v849
  %v851 = vsub.f32 1.0, %v850
  %v852 = vmul.f32 %v849, %v851
  %v853 = vadd.f32 %v849, %v852
  %vm854 = vweird.f32 %v848
  %vm855 = vweird.f32 %v849
  %vm856 = vmor %vm854, %vm855
  %v857 = vsel %vm856, %v849, %v853
  %v858 = vand.u32 2147483647, %v848
  %vm859 = vcmp.eq.f32.partialorder %v858, 8.507059e+37
  %v860 = vand.u32 %v848, 2147483648
  %v861 = vor.u32 1.1754944e-38, %v860
  %v862 = vsel %vm859, %v861, %v857
  %v863 = vmul.f32 1.0, %v862
  %v865 = vrot.slane %v816, 3
  %v867 = vmul.f32 %v840, %v865
  %v868 = vadd.f32 %v157, %v867
  %v869 = vtanh.pop %v868
  %v870 = vsub.f32 1.0, %v863
  %v871 = vmul.f32 %v870, %v869
  %v872 = vrot.slane %v754, 7
  %v874 = vmul.f32 %v863, %v872
  %v875 = vadd.f32 %v871, %v874
  %v877 = vrot.slane %v875, 5
  %879 = vmatpush.msra.mxu0 %v80
  %880 = vmatpush.msra.mxu0 %v77
  %881 = vmatpush.msra.mxu0 %v74
  %882 = vmatpush.msra.mxu0 %v71
  %883 = vmatpush.msra.mxu0 %v68
  %884 = vmatpush.msra.mxu0 %v65
  %885 = vmatpush.msra.mxu0 %v62
  %886 = vmatpush.msra.mxu0 %v59
  %887 = vmatpush.msra.mxu0 %v56
  %888 = vmatpush.msra.mxu0 %v53
  %889 = vmatpush.msra.mxu0 %v50
  %890 = vmatpush.msra.mxu0 %v47
  %891 = vmatpush.msra.mxu0 %v44
  %892 = vmatpush.msra.mxu0 %v41
  %893 = vmatpush.msra.mxu0 %v38
  %894 = vmatpush.msra.mxu0 %v35
  %895 = vmatmul.f32.gmra.mxu0 %v877
  %v896 = vpop.f32.mrf.mxu0
  %v897 = vadd.f32 %v160, %v896
  %898 = vdwg.mxu0
  %899 = vmatpush.msra.mxu0 %v81
  %900 = vmatpush.msra.mxu0 %v78
  %901 = vmatpush.msra.mxu0 %v75
  %902 = vmatpush.msra.mxu0 %v72
  %903 = vmatpush.msra.mxu0 %v69
  %904 = vmatpush.msra.mxu0 %v66
  %905 = vmatpush.msra.mxu0 %v63
  %906 = vmatpush.msra.mxu0 %v60
  %907 = vmatpush.msra.mxu0 %v57
  %908 = vmatpush.msra.mxu0 %v54
  %909 = vmatpush.msra.mxu0 %v51
  %910 = vmatpush.msra.mxu0 %v48
  %911 = vmatpush.msra.mxu0 %v45
  %912 = vmatpush.msra.mxu0 %v42
  %913 = vmatpush.msra.mxu0 %v39
  %914 = vmatpush.msra.mxu0 %v36
  %915 = vmatmul.f32.gmra.mxu0 %v877
  %v916 = vpop.f32.mrf.mxu0
  %v917 = vadd.f32 %v161, %v916
  %918 = vdwg.mxu0
  %919 = vmatpush.msra.mxu0 %v82
  %920 = vmatpush.msra.mxu0 %v79
  %921 = vmatpush.msra.mxu0 %v76
  %922 = vmatpush.msra.mxu0 %v73
  %923 = vmatpush.msra.mxu0 %v70
  %924 = vmatpush.msra.mxu0 %v67
  %925 = vmatpush.msra.mxu0 %v64
  %926 = vmatpush.msra.mxu0 %v61
  %927 = vmatpush.msra.mxu0 %v58
  %928 = vmatpush.msra.mxu0 %v55
  %929 = vmatpush.msra.mxu0 %v52
  %930 = vmatpush.msra.mxu0 %v49
  %931 = vmatpush.msra.mxu0 %v46
  %932 = vmatpush.msra.mxu0 %v43
  %933 = vmatpush.msra.mxu0 %v40
  %934 = vmatpush.msra.mxu0 %v37
  %935 = vmatmul.f32.gmra.mxu0 %v877
  %v936 = vpop.f32.mrf.mxu0
  %v937 = vadd.f32 %v162, %v936
  %938 = vdwg.mxu0
  %v940 = vrot.slane %v897, 2
  %v942 = vadd.f32 %v117, %v940
  %v943 = vxor.u32 %v942, 2147483648
  %v944 = vmul.f32 %v943, 1.442695
  %v945 = vpow.pop %v944
  %v946 = vadd.f32 %v945, 1.0
  %v947 = vrcp.pop %v946
  %v948 = vmul.f32 %v946, %v947
  %v949 = vsub.f32 1.0, %v948
  %v950 = vmul.f32 %v947, %v949
  %v951 = vadd.f32 %v947, %v950
  %vm952 = vweird.f32 %v946
  %vm953 = vweird.f32 %v947
  %vm954 = vmor %vm952, %vm953
  %v955 = vsel %vm954, %v947, %v951
  %v956 = vand.u32 2147483647, %v946
  %vm957 = vcmp.eq.f32.partialorder %v956, 8.507059e+37
  %v958 = vand.u32 %v946, 2147483648
  %v959 = vor.u32 1.1754944e-38, %v958
  %v960 = vsel %vm957, %v959, %v955
  %v961 = vmul.f32 1.0, %v960
  %v963 = vrot.slane %v917, 2
  %v965 = vadd.f32 %v137, %v963
  %v966 = vxor.u32 %v965, 2147483648
  %v967 = vmul.f32 %v966, 1.442695
  %v968 = vpow.pop %v967
  %v969 = vadd.f32 %v968, 1.0
  %v970 = vrcp.pop %v969
  %v971 = vmul.f32 %v969, %v970
  %v972 = vsub.f32 1.0, %v971
  %v973 = vmul.f32 %v970, %v972
  %v974 = vadd.f32 %v970, %v973
  %vm975 = vweird.f32 %v969
  %vm976 = vweird.f32 %v970
  %vm977 = vmor %vm975, %vm976
  %v978 = vsel %vm977, %v970, %v974
  %v979 = vand.u32 2147483647, %v969
  %vm980 = vcmp.eq.f32.partialorder %v979, 8.507059e+37
  %v981 = vand.u32 %v969, 2147483648
  %v982 = vor.u32 1.1754944e-38, %v981
  %v983 = vsel %vm980, %v982, %v978
  %v984 = vmul.f32 1.0, %v983
  %v986 = vrot.slane %v937, 2
  %v988 = vmul.f32 %v961, %v986
  %v989 = vadd.f32 %v157, %v988
  %v990 = vtanh.pop %v989
  %v991 = vsub.f32 1.0, %v984
  %v992 = vmul.f32 %v991, %v990
  %v993 = vrot.slane %v875, 7
  %v995 = vmul.f32 %v984, %v993
  %v996 = vadd.f32 %v992, %v995
  %v998 = vrot.slane %v996, 6
  %1000 = vmatpush.msra.mxu0 %v80
  %1001 = vmatpush.msra.mxu0 %v77
  %1002 = vmatpush.msra.mxu0 %v74
  %1003 = vmatpush.msra.mxu0 %v71
  %1004 = vmatpush.msra.mxu0 %v68
  %1005 = vmatpush.msra.mxu0 %v65
  %1006 = vmatpush.msra.mxu0 %v62
  %1007 = vmatpush.msra.mxu0 %v59
  %1008 = vmatpush.msra.mxu0 %v56
  %1009 = vmatpush.msra.mxu0 %v53
  %1010 = vmatpush.msra.mxu0 %v50
  %1011 = vmatpush.msra.mxu0 %v47
  %1012 = vmatpush.msra.mxu0 %v44
  %1013 = vmatpush.msra.mxu0 %v41
  %1014 = vmatpush.msra.mxu0 %v38
  %1015 = vmatpush.msra.mxu0 %v35
  %1016 = vmatmul.f32.gmra.mxu0 %v998
  %v1017 = vpop.f32.mrf.mxu0
  %v1018 = vadd.f32 %v160, %v1017
  %1019 = vdwg.mxu0
  %1020 = vmatpush.msra.mxu0 %v81
  %1021 = vmatpush.msra.mxu0 %v78
  %1022 = vmatpush.msra.mxu0 %v75
  %1023 = vmatpush.msra.mxu0 %v72
  %1024 = vmatpush.msra.mxu0 %v69
  %1025 = vmatpush.msra.mxu0 %v66
  %1026 = vmatpush.msra.mxu0 %v63
  %1027 = vmatpush.msra.mxu0 %v60
  %1028 = vmatpush.msra.mxu0 %v57
  %1029 = vmatpush.msra.mxu0 %v54
  %1030 = vmatpush.msra.mxu0 %v51
  %1031 = vmatpush.msra.mxu0 %v48
  %1032 = vmatpush.msra.mxu0 %v45
  %1033 = vmatpush.msra.mxu0 %v42
  %1034 = vmatpush.msra.mxu0 %v39
  %1035 = vmatpush.msra.mxu0 %v36
  %1036 = vmatmul.f32.gmra.mxu0 %v998
  %v1037 = vpop.f32.mrf.mxu0
  %v1038 = vadd.f32 %v161, %v1037
  %1039 = vdwg.mxu0
  %1040 = vmatpush.msra.mxu0 %v82
  %1041 = vmatpush.msra.mxu0 %v79
  %1042 = vmatpush.msra.mxu0 %v76
  %1043 = vmatpush.msra.mxu0 %v73
  %1044 = vmatpush.msra.mxu0 %v70
  %1045 = vmatpush.msra.mxu0 %v67
  %1046 = vmatpush.msra.mxu0 %v64
  %1047 = vmatpush.msra.mxu0 %v61
  %1048 = vmatpush.msra.mxu0 %v58
  %1049 = vmatpush.msra.mxu0 %v55
  %1050 = vmatpush.msra.mxu0 %v52
  %1051 = vmatpush.msra.mxu0 %v49
  %1052 = vmatpush.msra.mxu0 %v46
  %1053 = vmatpush.msra.mxu0 %v43
  %1054 = vmatpush.msra.mxu0 %v40
  %1055 = vmatpush.msra.mxu0 %v37
  %1056 = vmatmul.f32.gmra.mxu0 %v998
  %v1057 = vpop.f32.mrf.mxu0
  %v1058 = vadd.f32 %v162, %v1057
  %1059 = vdwg.mxu0
  %v1061 = vrot.slane %v1018, 1
  %v1063 = vadd.f32 %v117, %v1061
  %v1064 = vxor.u32 %v1063, 2147483648
  %v1065 = vmul.f32 %v1064, 1.442695
  %v1066 = vpow.pop %v1065
  %v1067 = vadd.f32 %v1066, 1.0
  %v1068 = vrcp.pop %v1067
  %v1069 = vmul.f32 %v1067, %v1068
  %v1070 = vsub.f32 1.0, %v1069
  %v1071 = vmul.f32 %v1068, %v1070
  %v1072 = vadd.f32 %v1068, %v1071
  %vm1073 = vweird.f32 %v1067
  %vm1074 = vweird.f32 %v1068
  %vm1075 = vmor %vm1073, %vm1074
  %v1076 = vsel %vm1075, %v1068, %v1072
  %v1077 = vand.u32 2147483647, %v1067
  %vm1078 = vcmp.eq.f32.partialorder %v1077, 8.507059e+37
  %v1079 = vand.u32 %v1067, 2147483648
  %v1080 = vor.u32 1.1754944e-38, %v1079
  %v1081 = vsel %vm1078, %v1080, %v1076
  %v1082 = vmul.f32 1.0, %v1081
  %v1084 = vrot.slane %v1038, 1
  %v1086 = vadd.f32 %v137, %v1084
  %v1087 = vxor.u32 %v1086, 2147483648
  %v1088 = vmul.f32 %v1087, 1.442695
  %v1089 = vpow.pop %v1088
  %v1090 = vadd.f32 %v1089, 1.0
  %v1091 = vrcp.pop %v1090
  %v1092 = vmul.f32 %v1090, %v1091
  %v1093 = vsub.f32 1.0, %v1092
  %v1094 = vmul.f32 %v1091, %v1093
  %v1095 = vadd.f32 %v1091, %v1094
  %vm1096 = vweird.f32 %v1090
  %vm1097 = vweird.f32 %v1091
  %vm1098 = vmor %vm1096, %vm1097
  %v1099 = vsel %vm1098, %v1091, %v1095
  %v1100 = vand.u32 2147483647, %v1090
  %vm1101 = vcmp.eq.f32.partialorder %v1100, 8.507059e+37
  %v1102 = vand.u32 %v1090, 2147483648
  %v1103 = vor.u32 1.1754944e-38, %v1102
  %v1104 = vsel %vm1101, %v1103, %v1099
  %v1105 = vmul.f32 1.0, %v1104
  %v1107 = vrot.slane %v1058, 1
  %v1109 = vmul.f32 %v1082, %v1107
  %v1110 = vadd.f32 %v157, %v1109
  %v1111 = vtanh.pop %v1110
  %v1112 = vsub.f32 1.0, %v1105
  %v1113 = vmul.f32 %v1112, %v1111
  %v1114 = vrot.slane %v996, 7
  %v1116 = vmul.f32 %v1105, %v1114
  %v1117 = vadd.f32 %v1113, %v1116
  %vm1118 = vcmask 1040384
  %v1119 = vsel %vm1118, %v272, %v391
  %vm1120 = vcmask 1041408
  %v1121 = vsel %vm1120, %v1119, %v512
  %vm1122 = vcmask 1042432
  %v1123 = vsel %vm1122, %v1121, %v633
  %vm1124 = vcmask 1043456
  %v1125 = vsel %vm1124, %v1123, %v754
  %vm1126 = vcmask 1044480
  %v1127 = vsel %vm1126, %v1125, %v875
  %vm1128 = vcmask 1045504
  %v1129 = vsel %vm1128, %v1127, %v996
  %vm1130 = vcmask 1046528
  %v1131 = vsel %vm1130, %v1129, %v1117
  %v1133 = vrot.slane %v1117, 7
  %v1135 = vrot.slane %v996, 5
  %v1137 = vrot.slane %v875, 3
  %v1139 = vrot.slane %v754, 1
  %v1141 = vrot.slane %v512, 5
  %v1143 = vrot.slane %v391, 3
  %v1145 = vrot.slane %v272, 1
  %v1147 = vsel %vm1118, %v1133, %v1135
  %v1148 = vsel %vm1120, %v1147, %v1137
  %v1149 = vsel %vm1122, %v1148, %v1139
  %v1150 = vsel %vm1124, %v1149, %v751
  %v1151 = vsel %vm1126, %v1150, %v1141
  %v1152 = vsel %vm1128, %v1151, %v1143
  %v1153 = vsel %vm1130, %v1152, %v1145
  %vm1154 = vcmask 261120
  %v1155 = vsel %vm1154, %v1131, %v1153
  %v1156 = vld [vmem:[%s1 + $0x258] sm:$0xff]
  %v1157 = vld [vmem:[%s1 + $0x270] sm:$0xff]
  %v1158 = vld [vmem:[%s1 + $0x288] sm:$0xff]
  %v1159 = vld [vmem:[%s1 + $0x2a0] sm:$0xff]
  %v1160 = vld [vmem:[%s1 + $0x2b8] sm:$0xff]
  %v1161 = vld [vmem:[%s1 + $0x2d0] sm:$0xff]
  %v1162 = vld [vmem:[%s1 + $0x2e8] sm:$0xff]
  %v1163 = vld [vmem:[%s1 + $0x300] sm:$0xff]
  %v1164 = vld [vmem:[%s1 + $0x318] sm:$0xff]
  %v1165 = vld [vmem:[%s1 + $0x330] sm:$0xff]
  %v1166 = vld [vmem:[%s1 + $0x348] sm:$0xff]
  %v1167 = vld [vmem:[%s1 + $0x360] sm:$0xff]
  %v1168 = vld [vmem:[%s1 + $0x378] sm:$0xff]
  %v1169 = vld [vmem:[%s1 + $0x390] sm:$0xff]
  %v1170 = vld [vmem:[%s1 + $0x3a8] sm:$0xff]
  %v1171 = vld [vmem:[%s1 + $0x3c0] sm:$0xff]
  %v1172 = vld [vmem:[%s1 + $0x3d8] sm:$0xff]
  %v1173 = vld [vmem:[%s1 + $0x3f0] sm:$0xff]
  %v1174 = vld [vmem:[%s1 + $0x408] sm:$0xff]
  %v1175 = vld [vmem:[%s1 + $0x420] sm:$0xff]
  %v1176 = vld [vmem:[%s1 + $0x438] sm:$0xff]
  %v1177 = vld [vmem:[%s1 + $0x450] sm:$0xff]
  %v1178 = vld [vmem:[%s1 + $0x468] sm:$0xff]
  %v1179 = vld [vmem:[%s1 + $0x480] sm:$0xff]
  %v1180 = vld [vmem:[%s1 + $0x498] sm:$0xff]
  %v1181 = vld [vmem:[%s1 + $0x4b0] sm:$0xff]
  %v1182 = vld [vmem:[%s1 + $0x4c8] ss:$0 sm:$0xff]
  %v1184 = vsel %vm95, %v1155, 0
  %1186 = vmatpush.msra.mxu0 0.0
  %1187 = vmatpush.msra.mxu0 0.0
  %1188 = vmatpush.msra.mxu0 0.0
  %1189 = vmatpush.msra.mxu0 0.0
  %1190 = vmatpush.msra.mxu0 0.0
  %1191 = vmatpush.msra.mxu0 0.0
  %1192 = vmatpush.msra.mxu0 0.0
  %1193 = vmatpush.msra.mxu0 0.0
  %1194 = vmatpush.msra.mxu0 %v1163
  %1195 = vmatpush.msra.mxu0 %v1162
  %1196 = vmatpush.msra.mxu0 %v1161
  %1197 = vmatpush.msra.mxu0 %v1160
  %1198 = vmatpush.msra.mxu0 %v1159
  %1199 = vmatpush.msra.mxu0 %v1158
  %1200 = vmatpush.msra.mxu0 %v1157
  %1201 = vmatpush.msra.mxu0 %v1156
  %1202 = vmatmul.f32.gmra.mxu0 %v1184
  %v1203 = vpop.f32.mrf.mxu0
  %v1204 = vadd.f32 0.0, %v1203
  %1205 = vdwg.mxu0
  %v1206 = vtanh.pop %v1204
  %vm1207 = vcmask 130048
  %v1209 = vsel %vm1207, %v1206, 0
  %1211 = vmatpush.msra.mxu0 0.0
  %1212 = vmatpush.msra.mxu0 0.0
  %1213 = vmatpush.msra.mxu0 0.0
  %1214 = vmatpush.msra.mxu0 0.0
  %1215 = vmatpush.msra.mxu0 0.0
  %1216 = vmatpush.msra.mxu0 0.0
  %1217 = vmatpush.msra.mxu0 0.0
  %1218 = vmatpush.msra.mxu0 0.0
  %1219 = vmatpush.msra.mxu0 0.0
  %1220 = vmatpush.msra.mxu0 0.0
  %1221 = vmatpush.msra.mxu0 0.0
  %1222 = vmatpush.msra.mxu0 0.0
  %1223 = vmatpush.msra.mxu0 0.0
  %1224 = vmatpush.msra.mxu0 0.0
  %1225 = vmatpush.msra.mxu0 %v1165
  %1226 = vmatpush.msra.mxu0 %v1164
  %1227 = vmatmul.f32.gmra.mxu0 %v1209
  %v1228 = vpop.f32.mrf.mxu0
  %v1229 = vadd.f32 0.0, %v1228
  %1230 = vdwg.mxu0
  %vm1231 = vcmask 15360
  %v1232 = vsel %vm1231, %v1229, -inf
  %v1233 = vrot.slane %v1232, 4
  %v1234 = vmax.f32 %v1232, %v1233
  %v1235 = vrot.slane %v1234, 2
  %v1236 = vmax.f32 %v1234, %v1235
  %v1237 = vrot.slane %v1236, 1
  %v1238 = vmax.f32 %v1236, %v1237
  %v1239 = vsub.f32 %v1229, %v1238
  %v1240 = vmul.f32 %v1239, 1.442695
  %v1241 = vpow.pop %v1240
  %v1242 = vsel %vm1231, %v1241, 0.0
  %v1243 = vrot.slane %v1242, 4
  %v1244 = vadd.f32 %v1242, %v1243
  %v1245 = vrot.slane %v1244, 2
  %v1246 = vadd.f32 %v1244, %v1245
  %v1247 = vrot.slane %v1246, 1
  %v1248 = vadd.f32 %v1246, %v1247
  %v1249 = vrcp.pop %v1248
  %v1250 = vmul.f32 %v1248, %v1249
  %v1251 = vsub.f32 1.0, %v1250
  %v1252 = vmul.f32 %v1249, %v1251
  %v1253 = vadd.f32 %v1249, %v1252
  %vm1254 = vweird.f32 %v1248
  %vm1255 = vweird.f32 %v1249
  %vm1256 = vmor %vm1254, %vm1255
  %v1257 = vsel %vm1256, %v1249, %v1253
  %v1258 = vand.u32 2147483647, %v1248
  %vm1259 = vcmp.eq.f32.partialorder %v1258, 8.507059e+37
  %v1260 = vand.u32 %v1248, 2147483648
  %v1261 = vor.u32 1.1754944e-38, %v1260
  %v1262 = vsel %vm1259, %v1261, %v1257
  %v1263 = vmul.f32 %v1241, %v1262
  %1265 = vset.pattern.permute.xlu0 0
  %1266 = vperm.xlu0 %1265, %v1263
  %v1267 = vpop.permute.xlu0 %1266
  %1269 = vset.pattern.permute.xlu0 1
  %1270 = vperm.xlu0 %1269, %v1263
  %v1271 = vpop.permute.xlu0 %1270
  %v1273 = vsel %vm95, %v1267, %v1271
  %1274 = vrot.lane.b32.xlu0 %v1155, 64
  %v1275 = vpop.permute.xlu0 %1274
  %v1277 = vsel %vm95, %v1155, %v1275
  %v1278 = vmul.f32 %v1273, %v1277
  %v1279 = vrot.slane %v1278, 4
  %v1280 = vadd.f32 %v1278, %v1279
  %v1281 = vrot.slane %v1280, 2
  %v1282 = vadd.f32 %v1280, %v1281
  %v1283 = vrot.slane %v1282, 1
  %v1284 = vadd.f32 %v1282, %v1283
  %1285 = vmatpush.msra.mxu0 %v1181
  %1286 = vmatpush.msra.mxu0 %v1180
  %1287 = vmatpush.msra.mxu0 %v1179
  %1288 = vmatpush.msra.mxu0 %v1178
  %1289 = vmatpush.msra.mxu0 %v1177
  %1290 = vmatpush.msra.mxu0 %v1176
  %1291 = vmatpush.msra.mxu0 %v1175
  %1292 = vmatpush.msra.mxu0 %v1174
  %1293 = vmatpush.msra.mxu0 %v1173
  %1294 = vmatpush.msra.mxu0 %v1172
  %1295 = vmatpush.msra.mxu0 %v1171
  %1296 = vmatpush.msra.mxu0 %v1170
  %1297 = vmatpush.msra.mxu0 %v1169
  %1298 = vmatpush.msra.mxu0 %v1168
  %1299 = vmatpush.msra.mxu0 %v1167
  %1300 = vmatpush.msra.mxu0 %v1166
  %1301 = vmatmul.f32.gmra.mxu0 %v1284
  %v1302 = vpop.f32.mrf.mxu0
  %v1303 = vadd.f32 %v1182, %v1302
  %1304 = vdwg.mxu0
  %vm1305 = vcmask 8192
  %v1306 = vsel %vm1305, %v1303, -inf
  %1307 = vmax.xlane.f32.xlu0 %v1306
  %v1308 = vpop.xlane.xlu0 %1307
  %v1309 = vsub.f32 %v1303, %v1308
  %v1310 = vmul.f32 %v1309, 1.442695
  %v1311 = vpow.pop %v1310
  %v1312 = vsel %vm1305, %v1311, 0.0
  %1313 = vadd.xlane.f32.xlu0 %v1312
  %v1314 = vpop.xlane.xlu0 %1313
  %v1315 = vrcp.pop %v1314
  %v1316 = vmul.f32 %v1314, %v1315
  %v1317 = vsub.f32 1.0, %v1316
  %v1318 = vmul.f32 %v1315, %v1317
  %v1319 = vadd.f32 %v1315, %v1318
  %vm1320 = vweird.f32 %v1314
  %vm1321 = vweird.f32 %v1315
  %vm1322 = vmor %vm1320, %vm1321
  %v1323 = vsel %vm1322, %v1315, %v1319
  %v1324 = vand.u32 2147483647, %v1314
  %vm1325 = vcmp.eq.f32.partialorder %v1324, 8.507059e+37
  %v1326 = vand.u32 %v1314, 2147483648
  %v1327 = vor.u32 1.1754944e-38, %v1326
  %v1328 = vsel %vm1325, %v1327, %v1323
  %v1329 = vmul.f32 %v1311, %v1328
  %v1330 = vperm.slane %v1329, 0
  %1331 = vrot.lane.b32.xlu0 %v1263, 64
  %v1332 = vpop.permute.xlu0 %1331
  %1335 = vrot.lane.b32.xlu0 %v1330, 66
  %v1336 = vpop.permute.xlu0 %1335
  %v1338 = vsel %vm95, %v1155, %v1332
  %vm1339 = vcmask 539648
  %v1340 = vsel %vm1339, %v1338, %v1336
  %vm1341 = vcmask 556032
  %v1342 = vsel %vm1341, %v1340, 0.0
  %1343 = vst [vmem:[%s2] sm:$0xff] %v1342
  // Predicated region
  $region10: #{sentence_classifier_forward.1} parent=0 // pred_check
    _
  $region11: #{sentence_classifier_forward.1} parent=0 // pred_check_branch
    %1345 = sbr.rel (0) target = $region13
  $region12: #{sentence_classifier_forward.1} parent=0 // pred_region
    _
  $region13: #{sentence_classifier_forward.1} parent=0 // pred_fallthru
    _
  // Predicated region
  $region14: #{sentence_classifier_forward.1} parent=0 // pred_check
    _
  $region15: #{sentence_classifier_forward.1} parent=0 // pred_check_branch
    %1347 = sbr.rel (0) target = $region17
  $region16: #{sentence_classifier_forward.1} parent=0 // pred_region
    _
  $region17: #{sentence_classifier_forward.1} parent=0 // pred_fallthru
    _

</llo_original>
